<compile_context>
chip_gen: v7x
topology: tpu7x:2x2x1
jax: 0.10.0
libtpu: 0.0.40
codegen_flags: <defaults>
</compile_context>

<pallas_src>
import functools

import numpy as np
import jax
import jax.numpy as jnp
from jax import lax
from jax.experimental import pallas as pl
from jax.experimental.pallas import tpu as pltpu


def _round_up(x, mult):
    return int(pl.cdiv(int(x), mult)) * mult


def _soft_threshold(z, theta):
    # soft_threshold(z, theta, p=0) == sign(z) * relu(|z| - theta)
    #                              == z - clip(z, -theta, theta)
    return z - jnp.clip(z, -theta, theta)


def _ista_kernel(c_ref, w_ref, x_ref, *, k, theta, row_split, unroll, carry_dtype):
    """All k ISTA iterations for one batch tile, fully VMEM-resident.

    Fused iteration:  x <- soft_threshold(x @ W + c, theta)
    Iteration 0 is peeled (x0 == 0  =>  x1 = soft_threshold(c)).
    When row_split > 0 the tile is processed as two independent row halves so
    the LLO scheduler can overlap MXU (matmul) and VPU (soft-threshold) work.
    """
    w = w_ref[...]                                       # (Np, Np) resident weight
    tb = x_ref.shape[0]

    if row_split:
        row_slices = (pl.ds(0, row_split), pl.ds(row_split, tb - row_split))
    else:
        row_slices = (pl.ds(0, tb),)

    cs = [c_ref[s, :] for s in row_slices]               # f32 constant term(s)
    # Peeled iteration 0.
    xs = tuple(_soft_threshold(c, theta).astype(carry_dtype) for c in cs)

    def body(_, xs):
        new = []
        for x, c in zip(xs, cs):
            z = jnp.dot(x, w, preferred_element_type=jnp.float32) + c
            new.append(_soft_threshold(z, theta).astype(carry_dtype))
        return tuple(new)

    # Remaining k-1 iterations (strictly data-dependent chain).
    xs = lax.fori_loop(0, k - 1, body, xs, unroll=unroll)

    for s, x in zip(row_slices, xs):
        x_ref[s, :] = x.astype(x_ref.dtype)


def _lipschitz_power_iteration(phi, iters=200):
    """L = max eigenvalue of phi @ phi.T via power iteration (pure JAX)."""
    g = phi @ phi.T
    v = jnp.full((g.shape[0],), 1.0 / np.sqrt(g.shape[0]), jnp.float32)

    def body(_, v):
        w = g @ v
        return w / jnp.linalg.norm(w)

    v = lax.fori_loop(0, iters, body, v)
    return jnp.dot(v, g @ v) / jnp.dot(v, v)


def ista_pallas(y, phi, k, lmbda, *, L=None, block_b=256,
                weight_dtype=jnp.bfloat16):
    """Pallas implementation of ISTA.forward. Returns (x, 0, 0).

    weight_dtype=jnp.bfloat16 (default): fast MXU path, f32 accumulation.
    weight_dtype=jnp.float32: bit-for-bit closer to the PyTorch reference.
    """
    y = jnp.asarray(y, jnp.float32)
    phi = jnp.asarray(phi, jnp.float32)
    B, m = y.shape
    m2, n = phi.shape
    assert m == m2, "y and phi measurement dimensions must match"

    if k <= 0:
        return jnp.zeros((B, n), jnp.float32), 0, 0

    if L is None:
        L = _lipschitz_power_iteration(phi)
    # theta is baked into the kernel as a compile-time constant.
    L = float(L)
    inv_L = 1.0 / L
    theta = float(lmbda) / L

    # ---- Fused operands (once, outside the kernel) ----
    W = jnp.eye(n, dtype=jnp.float32) - inv_L * (phi.T @ phi)   # (n, n)
    c = inv_L * (y @ phi)                                       # (B, n)

    # ---- TPU-friendly padding / tiling ----
    Np = _round_up(n, 128)                      # lane-dense output, MXU aligned
    if B <= 8:
        TB = _round_up(B, 8)
    else:
        # >= 2 batch tiles (dual-TC on v7x + c-tile pipelining), tiles up to
        # block_b rows (256 fills the v6e/v7x 256x256 MXU M dimension).
        n_tiles = max(2, int(pl.cdiv(B, block_b)))
        TB = _round_up(pl.cdiv(B, n_tiles), 8)
    Bp = _round_up(B, TB)

    # Zero padding is exact: soft_threshold(0) == 0 and padded W rows/cols are
    # zero, so padded coordinates stay exactly 0 through every iteration.
    W_pad = jnp.zeros((Np, Np), jnp.float32).at[:n, :n].set(W).astype(weight_dtype)
    c_pad = jnp.zeros((Bp, Np), jnp.float32).at[:B, :n].set(c)

    # Split the tile into two 8-aligned row halves when possible (MXU/VPU overlap).
    row_split = TB // 2 if (TB >= 16 and TB % 16 == 0) else 0
    # Full unroll only for short chains; partial unroll keeps LLO visibility
    # without bundle/compile-time blowup for long k.
    unroll = True if k <= 16 else 4

    carry_dtype = jnp.dtype(weight_dtype)
    kernel = functools.partial(_ista_kernel, k=k, theta=theta,
                               row_split=row_split, unroll=unroll,
                               carry_dtype=carry_dtype)

    # VMEM budget: W single-buffered + double-buffered c and out tiles.
    w_bytes = Np * Np * jnp.dtype(weight_dtype).itemsize
    io_bytes = 2 * (TB * Np * 4) * 2
    vmem_limit = int(min(60 << 20, max(24 << 20, 2 * (w_bytes + io_bytes))))

    cost = pl.CostEstimate(
        flops=2 * k * Bp * Np * Np,
        transcendentals=0,
        bytes_accessed=w_bytes + 2 * Bp * Np * 4,
    )

    def _call(use_buffered_w):
        if use_buffered_w:
            # W's index_map is constant -> one buffer suffices (halves W VMEM).
            w_spec = pl.BlockSpec((Np, Np), lambda i: (0, 0),
                                  pipeline_mode=pl.Buffered(1))
        else:
            w_spec = pl.BlockSpec((Np, Np), lambda i: (0, 0))
        return pl.pallas_call(
            kernel,
            out_shape=jax.ShapeDtypeStruct((Bp, Np), jnp.float32),
            grid=(Bp // TB,),
            in_specs=[
                pl.BlockSpec((TB, Np), lambda i: (i, 0)),   # c: tiled over batch
                w_spec,                                     # W: invariant, resident
            ],
            out_specs=pl.BlockSpec((TB, Np), lambda i: (i, 0)),
            compiler_params=pltpu.CompilerParams(
                dimension_semantics=("parallel",),
                vmem_limit_bytes=vmem_limit,
            ),
            cost_estimate=cost,
        )(c_pad, W_pad)

    try:
        x_pad = _call(True)
    except Exception:
        # Fallback for JAX versions without pipeline_mode / Buffered(1) support.
        x_pad = _call(False)

    return x_pad[:B, :n], 0, 0


def ista_reference(y, phi, k, L, lmbda):
    """Pure-JAX reference mirroring the PyTorch forward (two matmuls per iter)."""
    B = y.shape[0]
    n = phi.shape[1]
    x = jnp.zeros((B, n), jnp.float32)
    for _ in range(k):
        a = y - x @ phi.T
        b = a @ phi
        z = x + (1.0 / L) * b
        x = jnp.sign(z) * jnp.maximum(jnp.abs(z) - (lmbda / L), 0.0)
    return x


if __name__ == "__main__":
    # Small problem: m measurements, n-dim sparse signal, k ISTA iterations.
    B, m, n, k = 8, 16, 32, 8
    lmbda = 0.1

    key = jax.random.PRNGKey(0)
    k_phi, k_y, k_y2 = jax.random.split(key, 3)
    phi = jax.random.normal(k_phi, (m, n), jnp.float32) / jnp.sqrt(m)
    y = jax.random.normal(k_y, (B, m), jnp.float32)

    L = float(_lipschitz_power_iteration(phi))
    x_ref = jax.block_until_ready(ista_reference(y, phi, k, L, lmbda))

    # f32 weight path: tight match against the two-matmul reference
    # (fused x@W + c only changes rounding order).
    x_f32, _, _ = ista_pallas(y, phi, k, lmbda, L=L, weight_dtype=jnp.float32)
    x_f32 = jax.block_until_ready(x_f32)
    np.testing.assert_allclose(np.asarray(x_f32), np.asarray(x_ref),
                               rtol=1e-4, atol=2e-5)

    # Default bf16 path: error compounds over k iterations -> looser tolerance.
    x_bf16, _, _ = ista_pallas(y, phi, k, lmbda, L=L)
    x_bf16 = jax.block_until_ready(x_bf16)
    np.testing.assert_allclose(np.asarray(x_bf16), np.asarray(x_ref),
                               rtol=1e-1, atol=5e-2)

    # Larger batch: exercises >= 2 grid steps and the intra-tile row split.
    B2 = 64
    y2 = jax.random.normal(k_y2, (B2, m), jnp.float32)
    x2_ref = jax.block_until_ready(ista_reference(y2, phi, k, L, lmbda))
    x2, _, _ = ista_pallas(y2, phi, k, lmbda, L=L)
    x2 = jax.block_until_ready(x2)
    np.testing.assert_allclose(np.asarray(x2), np.asarray(x2_ref),
                               rtol=1e-1, atol=5e-2)

    print("KERNEL_OK")
</pallas_src>

<mosaic_0001>
module attributes {stable_mosaic.version = 11 : i64} {
  func.func @_ista_kernel(%arg0: i32, %arg1: memref<8x128xf32, #tpu.memory_space<vmem>>, %arg2: memref<128x128xf32, #tpu.memory_space<vmem>>, %arg3: memref<8x128xf32, #tpu.memory_space<vmem>>) attributes {dimension_semantics = [#tpu.dimension_semantics<parallel>], iteration_bounds = array<i64: 1>, scalar_prefetch = 0 : i64, scratch_operands = 0 : i64, tpu.core_type = #tpu.core_type<tc>, window_params = [{transform_indices = @transform_0, window_bounds = array<i64: 8, 128>}, {pipeline_mode = #tpu.pipeline_mode<synchronous>, transform_indices = @transform_1, window_bounds = array<i64: 128, 128>}, {transform_indices = @transform_2, window_bounds = array<i64: 8, 128>}]} {
    %c0 = arith.constant 0 : index
    %c0_0 = arith.constant 0 : index
    %0 = vector.load %arg2[%c0, %c0_0] : memref<128x128xf32, #tpu.memory_space<vmem>>, vector<128x128xf32>
    %c0_1 = arith.constant 0 : index
    %c0_2 = arith.constant 0 : index
    %1 = vector.load %arg1[%c0_1, %c0_2] : memref<8x128xf32, #tpu.memory_space<vmem>>, vector<8x128xf32>
    %cst = arith.constant -0.01941121 : f32
    %cst_3 = arith.constant 0.01941121 : f32
    %2 = vector.broadcast %cst : f32 to vector<8x128xf32>
    %3 = arith.maximumf %2, %1 : vector<8x128xf32>
    %4 = vector.broadcast %cst_3 : f32 to vector<8x128xf32>
    %5 = arith.minimumf %4, %3 : vector<8x128xf32>
    %6 = arith.subf %1, %5 : vector<8x128xf32>
    %c0_i32 = arith.constant 0 : i32
    %cst_4 = arith.constant dense<0.000000e+00> : vector<8x128xf32>
    %7 = tpu.matmul %6, %0, %cst_4 {dimension_numbers = #tpu.dot_dimension_numbers<[1], [0], [0], [1], [0, 0, 1, 1], [], []>} : vector<8x128xf32>, vector<128x128xf32>, vector<8x128xf32> -> vector<8x128xf32>
    %8 = arith.addf %7, %1 : vector<8x128xf32>
    %cst_5 = arith.constant -0.01941121 : f32
    %cst_6 = arith.constant 0.01941121 : f32
    %9 = vector.broadcast %cst_5 : f32 to vector<8x128xf32>
    %10 = arith.maximumf %9, %8 : vector<8x128xf32>
    %11 = vector.broadcast %cst_6 : f32 to vector<8x128xf32>
    %12 = arith.minimumf %11, %10 : vector<8x128xf32>
    %13 = arith.subf %8, %12 : vector<8x128xf32>
    %c1_i32 = arith.constant 1 : i32
    %cst_7 = arith.constant dense<0.000000e+00> : vector<8x128xf32>
    %14 = tpu.matmul %13, %0, %cst_7 {dimension_numbers = #tpu.dot_dimension_numbers<[1], [0], [0], [1], [0, 0, 1, 1], [], []>} : vector<8x128xf32>, vector<128x128xf32>, vector<8x128xf32> -> vector<8x128xf32>
    %15 = arith.addf %14, %1 : vector<8x128xf32>
    %cst_8 = arith.constant -0.01941121 : f32
    %cst_9 = arith.constant 0.01941121 : f32
    %16 = vector.broadcast %cst_8 : f32 to vector<8x128xf32>
    %17 = arith.maximumf %16, %15 : vector<8x128xf32>
    %18 = vector.broadcast %cst_9 : f32 to vector<8x128xf32>
    %19 = arith.minimumf %18, %17 : vector<8x128xf32>
    %20 = arith.subf %15, %19 : vector<8x128xf32>
    %c2_i32 = arith.constant 2 : i32
    %cst_10 = arith.constant dense<0.000000e+00> : vector<8x128xf32>
    %21 = tpu.matmul %20, %0, %cst_10 {dimension_numbers = #tpu.dot_dimension_numbers<[1], [0], [0], [1], [0, 0, 1, 1], [], []>} : vector<8x128xf32>, vector<128x128xf32>, vector<8x128xf32> -> vector<8x128xf32>
    %22 = arith.addf %21, %1 : vector<8x128xf32>
    %cst_11 = arith.constant -0.01941121 : f32
    %cst_12 = arith.constant 0.01941121 : f32
    %23 = vector.broadcast %cst_11 : f32 to vector<8x128xf32>
    %24 = arith.maximumf %23, %22 : vector<8x128xf32>
    %25 = vector.broadcast %cst_12 : f32 to vector<8x128xf32>
    %26 = arith.minimumf %25, %24 : vector<8x128xf32>
    %27 = arith.subf %22, %26 : vector<8x128xf32>
    %c3_i32 = arith.constant 3 : i32
    %cst_13 = arith.constant dense<0.000000e+00> : vector<8x128xf32>
    %28 = tpu.matmul %27, %0, %cst_13 {dimension_numbers = #tpu.dot_dimension_numbers<[1], [0], [0], [1], [0, 0, 1, 1], [], []>} : vector<8x128xf32>, vector<128x128xf32>, vector<8x128xf32> -> vector<8x128xf32>
    %29 = arith.addf %28, %1 : vector<8x128xf32>
    %cst_14 = arith.constant -0.01941121 : f32
    %cst_15 = arith.constant 0.01941121 : f32
    %30 = vector.broadcast %cst_14 : f32 to vector<8x128xf32>
    %31 = arith.maximumf %30, %29 : vector<8x128xf32>
    %32 = vector.broadcast %cst_15 : f32 to vector<8x128xf32>
    %33 = arith.minimumf %32, %31 : vector<8x128xf32>
    %34 = arith.subf %29, %33 : vector<8x128xf32>
    %c4_i32 = arith.constant 4 : i32
    %cst_16 = arith.constant dense<0.000000e+00> : vector<8x128xf32>
    %35 = tpu.matmul %34, %0, %cst_16 {dimension_numbers = #tpu.dot_dimension_numbers<[1], [0], [0], [1], [0, 0, 1, 1], [], []>} : vector<8x128xf32>, vector<128x128xf32>, vector<8x128xf32> -> vector<8x128xf32>
    %36 = arith.addf %35, %1 : vector<8x128xf32>
    %cst_17 = arith.constant -0.01941121 : f32
    %cst_18 = arith.constant 0.01941121 : f32
    %37 = vector.broadcast %cst_17 : f32 to vector<8x128xf32>
    %38 = arith.maximumf %37, %36 : vector<8x128xf32>
    %39 = vector.broadcast %cst_18 : f32 to vector<8x128xf32>
    %40 = arith.minimumf %39, %38 : vector<8x128xf32>
    %41 = arith.subf %36, %40 : vector<8x128xf32>
    %c5_i32 = arith.constant 5 : i32
    %cst_19 = arith.constant dense<0.000000e+00> : vector<8x128xf32>
    %42 = tpu.matmul %41, %0, %cst_19 {dimension_numbers = #tpu.dot_dimension_numbers<[1], [0], [0], [1], [0, 0, 1, 1], [], []>} : vector<8x128xf32>, vector<128x128xf32>, vector<8x128xf32> -> vector<8x128xf32>
    %43 = arith.addf %42, %1 : vector<8x128xf32>
    %cst_20 = arith.constant -0.01941121 : f32
    %cst_21 = arith.constant 0.01941121 : f32
    %44 = vector.broadcast %cst_20 : f32 to vector<8x128xf32>
    %45 = arith.maximumf %44, %43 : vector<8x128xf32>
    %46 = vector.broadcast %cst_21 : f32 to vector<8x128xf32>
    %47 = arith.minimumf %46, %45 : vector<8x128xf32>
    %48 = arith.subf %43, %47 : vector<8x128xf32>
    %c6_i32 = arith.constant 6 : i32
    %cst_22 = arith.constant dense<0.000000e+00> : vector<8x128xf32>
    %49 = tpu.matmul %48, %0, %cst_22 {dimension_numbers = #tpu.dot_dimension_numbers<[1], [0], [0], [1], [0, 0, 1, 1], [], []>} : vector<8x128xf32>, vector<128x128xf32>, vector<8x128xf32> -> vector<8x128xf32>
    %50 = arith.addf %49, %1 : vector<8x128xf32>
    %cst_23 = arith.constant -0.01941121 : f32
    %cst_24 = arith.constant 0.01941121 : f32
    %51 = vector.broadcast %cst_23 : f32 to vector<8x128xf32>
    %52 = arith.maximumf %51, %50 : vector<8x128xf32>
    %53 = vector.broadcast %cst_24 : f32 to vector<8x128xf32>
    %54 = arith.minimumf %53, %52 : vector<8x128xf32>
    %55 = arith.subf %50, %54 : vector<8x128xf32>
    %c0_25 = arith.constant 0 : index
    %c0_26 = arith.constant 0 : index
    %56 = vector.load %arg3[%c0_25, %c0_26] : memref<8x128xf32, #tpu.memory_space<vmem>>, vector<8x128xf32>
    tpu.vector_store %arg3[%c0_25, %c0_26], %55 {strides = array<i32>} : memref<8x128xf32, #tpu.memory_space<vmem>>, vector<8x128xf32>,
    return
  }
  func.func @transform_0(%arg0: i32) -> (i32, i32) {
    %c0_i32 = arith.constant 0 : i32
    %c0_i32_0 = arith.constant 0 : i32
    return %arg0, %c0_i32 : i32, i32
  }
  func.func @transform_1(%arg0: i32) -> (i32, i32) {
    %c0_i32 = arith.constant 0 : i32
    %c0_i32_0 = arith.constant 0 : i32
    %c0_i32_1 = arith.constant 0 : i32
    return %c0_i32, %c0_i32_0 : i32, i32
  }
  func.func @transform_2(%arg0: i32) -> (i32, i32) {
    %c0_i32 = arith.constant 0 : i32
    %c0_i32_0 = arith.constant 0 : i32
    return %arg0, %c0_i32 : i32, i32
  }
}

module attributes {stable_mosaic.version = 11 : i64} {
  func.func @_ista_kernel(%arg0: i32, %arg1: memref<8x128xf32, #tpu.memory_space<vmem>>, %arg2: memref<128x128xf32, #tpu.memory_space<vmem>>, %arg3: memref<8x128xf32, #tpu.memory_space<vmem>>) attributes {dimension_semantics = [#tpu.dimension_semantics<parallel>], iteration_bounds = array<i64: 1>, scalar_prefetch = 0 : i64, scratch_operands = 0 : i64, tpu.core_type = #tpu.core_type<tc>, window_params = [{transform_indices = @transform_0, window_bounds = array<i64: 8, 128>}, {pipeline_mode = #tpu.pipeline_mode<synchronous>, transform_indices = @transform_1, window_bounds = array<i64: 128, 128>}, {transform_indices = @transform_2, window_bounds = array<i64: 8, 128>}]} {
    %c0 = arith.constant 0 : index
    %c0_0 = arith.constant 0 : index
    %0 = vector.load %arg2[%c0, %c0_0] : memref<128x128xf32, #tpu.memory_space<vmem>>, vector<128x128xf32>
    %c0_1 = arith.constant 0 : index
    %c0_2 = arith.constant 0 : index
    %1 = vector.load %arg1[%c0_1, %c0_2] : memref<8x128xf32, #tpu.memory_space<vmem>>, vector<8x128xf32>
    %cst = arith.constant -0.01941121 : f32
    %cst_3 = arith.constant 0.01941121 : f32
    %2 = vector.broadcast %cst : f32 to vector<8x128xf32>
    %3 = arith.maximumf %2, %1 : vector<8x128xf32>
    %4 = vector.broadcast %cst_3 : f32 to vector<8x128xf32>
    %5 = arith.minimumf %4, %3 : vector<8x128xf32>
    %6 = arith.subf %1, %5 : vector<8x128xf32>
    %c0_i32 = arith.constant 0 : i32
    %cst_4 = arith.constant dense<0.000000e+00> : vector<8x128xf32>
    %7 = tpu.matmul %6, %0, %cst_4 {dimension_numbers = #tpu.dot_dimension_numbers<[1], [0], [0], [1], [0, 0, 1, 1], [], []>} : vector<8x128xf32>, vector<128x128xf32>, vector<8x128xf32> -> vector<8x128xf32>
    %8 = arith.addf %7, %1 : vector<8x128xf32>
    %cst_5 = arith.constant -0.01941121 : f32
    %cst_6 = arith.constant 0.01941121 : f32
    %9 = vector.broadcast %cst_5 : f32 to vector<8x128xf32>
    %10 = arith.maximumf %9, %8 : vector<8x128xf32>
    %11 = vector.broadcast %cst_6 : f32 to vector<8x128xf32>
    %12 = arith.minimumf %11, %10 : vector<8x128xf32>
    %13 = arith.subf %8, %12 : vector<8x128xf32>
    %c1_i32 = arith.constant 1 : i32
    %cst_7 = arith.constant dense<0.000000e+00> : vector<8x128xf32>
    %14 = tpu.matmul %13, %0, %cst_7 {dimension_numbers = #tpu.dot_dimension_numbers<[1], [0], [0], [1], [0, 0, 1, 1], [], []>} : vector<8x128xf32>, vector<128x128xf32>, vector<8x128xf32> -> vector<8x128xf32>
    %15 = arith.addf %14, %1 : vector<8x128xf32>
    %cst_8 = arith.constant -0.01941121 : f32
    %cst_9 = arith.constant 0.01941121 : f32
    %16 = vector.broadcast %cst_8 : f32 to vector<8x128xf32>
    %17 = arith.maximumf %16, %15 : vector<8x128xf32>
    %18 = vector.broadcast %cst_9 : f32 to vector<8x128xf32>
    %19 = arith.minimumf %18, %17 : vector<8x128xf32>
    %20 = arith.subf %15, %19 : vector<8x128xf32>
    %c2_i32 = arith.constant 2 : i32
    %cst_10 = arith.constant dense<0.000000e+00> : vector<8x128xf32>
    %21 = tpu.matmul %20, %0, %cst_10 {dimension_numbers = #tpu.dot_dimension_numbers<[1], [0], [0], [1], [0, 0, 1, 1], [], []>} : vector<8x128xf32>, vector<128x128xf32>, vector<8x128xf32> -> vector<8x128xf32>
    %22 = arith.addf %21, %1 : vector<8x128xf32>
    %cst_11 = arith.constant -0.01941121 : f32
    %cst_12 = arith.constant 0.01941121 : f32
    %23 = vector.broadcast %cst_11 : f32 to vector<8x128xf32>
    %24 = arith.maximumf %23, %22 : vector<8x128xf32>
    %25 = vector.broadcast %cst_12 : f32 to vector<8x128xf32>
    %26 = arith.minimumf %25, %24 : vector<8x128xf32>
    %27 = arith.subf %22, %26 : vector<8x128xf32>
    %c3_i32 = arith.constant 3 : i32
    %cst_13 = arith.constant dense<0.000000e+00> : vector<8x128xf32>
    %28 = tpu.matmul %27, %0, %cst_13 {dimension_numbers = #tpu.dot_dimension_numbers<[1], [0], [0], [1], [0, 0, 1, 1], [], []>} : vector<8x128xf32>, vector<128x128xf32>, vector<8x128xf32> -> vector<8x128xf32>
    %29 = arith.addf %28, %1 : vector<8x128xf32>
    %cst_14 = arith.constant -0.01941121 : f32
    %cst_15 = arith.constant 0.01941121 : f32
    %30 = vector.broadcast %cst_14 : f32 to vector<8x128xf32>
    %31 = arith.maximumf %30, %29 : vector<8x128xf32>
    %32 = vector.broadcast %cst_15 : f32 to vector<8x128xf32>
    %33 = arith.minimumf %32, %31 : vector<8x128xf32>
    %34 = arith.subf %29, %33 : vector<8x128xf32>
    %c4_i32 = arith.constant 4 : i32
    %cst_16 = arith.constant dense<0.000000e+00> : vector<8x128xf32>
    %35 = tpu.matmul %34, %0, %cst_16 {dimension_numbers = #tpu.dot_dimension_numbers<[1], [0], [0], [1], [0, 0, 1, 1], [], []>} : vector<8x128xf32>, vector<128x128xf32>, vector<8x128xf32> -> vector<8x128xf32>
    %36 = arith.addf %35, %1 : vector<8x128xf32>
    %cst_17 = arith.constant -0.01941121 : f32
    %cst_18 = arith.constant 0.01941121 : f32
    %37 = vector.broadcast %cst_17 : f32 to vector<8x128xf32>
    %38 = arith.maximumf %37, %36 : vector<8x128xf32>
    %39 = vector.broadcast %cst_18 : f32 to vector<8x128xf32>
    %40 = arith.minimumf %39, %38 : vector<8x128xf32>
    %41 = arith.subf %36, %40 : vector<8x128xf32>
    %c5_i32 = arith.constant 5 : i32
    %cst_19 = arith.constant dense<0.000000e+00> : vector<8x128xf32>
    %42 = tpu.matmul %41, %0, %cst_19 {dimension_numbers = #tpu.dot_dimension_numbers<[1], [0], [0], [1], [0, 0, 1, 1], [], []>} : vector<8x128xf32>, vector<128x128xf32>, vector<8x128xf32> -> vector<8x128xf32>
    %43 = arith.addf %42, %1 : vector<8x128xf32>
    %cst_20 = arith.constant -0.01941121 : f32
    %cst_21 = arith.constant 0.01941121 : f32
    %44 = vector.broadcast %cst_20 : f32 to vector<8x128xf32>
    %45 = arith.maximumf %44, %43 : vector<8x128xf32>
    %46 = vector.broadcast %cst_21 : f32 to vector<8x128xf32>
    %47 = arith.minimumf %46, %45 : vector<8x128xf32>
    %48 = arith.subf %43, %47 : vector<8x128xf32>
    %c6_i32 = arith.constant 6 : i32
    %cst_22 = arith.constant dense<0.000000e+00> : vector<8x128xf32>
    %49 = tpu.matmul %48, %0, %cst_22 {dimension_numbers = #tpu.dot_dimension_numbers<[1], [0], [0], [1], [0, 0, 1, 1], [], []>} : vector<8x128xf32>, vector<128x128xf32>, vector<8x128xf32> -> vector<8x128xf32>
    %50 = arith.addf %49, %1 : vector<8x128xf32>
    %cst_23 = arith.constant -0.01941121 : f32
    %cst_24 = arith.constant 0.01941121 : f32
    %51 = vector.broadcast %cst_23 : f32 to vector<8x128xf32>
    %52 = arith.maximumf %51, %50 : vector<8x128xf32>
    %53 = vector.broadcast %cst_24 : f32 to vector<8x128xf32>
    %54 = arith.minimumf %53, %52 : vector<8x128xf32>
    %55 = arith.subf %50, %54 : vector<8x128xf32>
    %c0_25 = arith.constant 0 : index
    %c0_26 = arith.constant 0 : index
    %56 = vector.load %arg3[%c0_25, %c0_26] : memref<8x128xf32, #tpu.memory_space<vmem>>, vector<8x128xf32>
    tpu.vector_store %arg3[%c0_25, %c0_26], %55 {strides = array<i32>} : memref<8x128xf32, #tpu.memory_space<vmem>>, vector<8x128xf32>,
    return
  }
  func.func @transform_0(%arg0: i32) -> (i32, i32) {
    %c0_i32 = arith.constant 0 : i32
    %c0_i32_0 = arith.constant 0 : i32
    return %arg0, %c0_i32 : i32, i32
  }
  func.func @transform_1(%arg0: i32) -> (i32, i32) {
    %c0_i32 = arith.constant 0 : i32
    %c0_i32_0 = arith.constant 0 : i32
    %c0_i32_1 = arith.constant 0 : i32
    return %c0_i32, %c0_i32_0 : i32, i32
  }
  func.func @transform_2(%arg0: i32) -> (i32, i32) {
    %c0_i32 = arith.constant 0 : i32
    %c0_i32_0 = arith.constant 0 : i32
    return %arg0, %c0_i32 : i32, i32
  }
}

</mosaic_0001>

<llo_original>
// kernel: tpu_custom_call.1
$region0: #{tpu_custom_call.1}
  #allocation0 [shape = 'u32[]', space=smem, size = 0x4, offset = 0x4, fixed_abs, tag = 'smem constant byte address 0x4 - core index']
  #allocation1 [shape = 'u32[144,128]{1,0:T(1,128)}', space=vmem, size = 0x12000, scoped, tag = 'internal scratch']
  %s0 = inlined_call_operand.hbm [shape: f32[8,128], index: 0, kind: input, shape index: {}]
  %s1 = inlined_call_operand.hbm [shape: f32[128,128], index: 1, kind: input, shape index: {}]
  %s2 = inlined_call_operand.hbm [shape: f32[8,128], index: 2, kind: output, shape index: {}]
  %s3 = sld [smem:[#allocation0]]
  $region26: #{tpu_custom_call.1} parent=0
    _
  %s5 = ssub.s32 1, %s3
  %s6 = scalar_select 0, %s5, %s3
  $region1: #{tpu_custom_call.1} parent=0
    #allocation2 [shape = 'u8[4096]{0}', space=vmem, size = 0x1000, scoped, tag = 'input window, operand 0, single buffered']
    #allocation3 [shape = 's32[1]{0}', space=sflag, size = 0x4, scoped, tag = 'scoped memory for tpu_custom_call.1']
    #allocation4 [shape = 's32[1]{0}', space=sflag, size = 0x4, scoped, tag = 'scoped memory for tpu_custom_call.1']
    #allocation5 [shape = 'u8[65536]{0}', space=vmem, size = 0x10000, scoped, tag = 'input window, operand 1, single buffered']
    #allocation6 [shape = 's32[1]{0}', space=sflag, size = 0x4, scoped, tag = 'scoped memory for tpu_custom_call.1']
    #allocation7 [shape = 'u8[4096]{0}', space=vmem, size = 0x1000, scoped, tag = 'output window, operand 0, single buffered']
    %7 = vsyncpa [#allocation3], 0
    %8 = vsyncpa [#allocation6], 0
    %9 = vsyncpa [#allocation4], 0
    // Predicated region
    $region2: #{tpu_custom_call.1} parent=1 // pred_check
      _
    $region3: #{tpu_custom_call.1} parent=1 // pred_check_branch
      %11 = sbr.rel (0) target = $region5
    $region4: #{tpu_custom_call.1} parent=1 // pred_region
      %s13 = ssub.s32 128, 128
      %14 = vsyncadd [#allocation3], %s13
      %s16 = sshll.u32 [#allocation2], 4
      %s17 = int_to_ptr.vmem [resolvable:$true] %s16
      %19 = dma.hbm_to_vmem [thread:$0]  %s0, 128, %s17, [#allocation3]
    $region5: #{tpu_custom_call.1} parent=1 // pred_fallthru
      _
    // Predicated region
    $region6: #{tpu_custom_call.1} parent=1 // pred_check
      _
    $region7: #{tpu_custom_call.1} parent=1 // pred_check_branch
      %21 = sbr.rel (0) target = $region9
    $region8: #{tpu_custom_call.1} parent=1 // pred_region
      %s23 = ssub.s32 2048, 2048
      %24 = vsyncadd [#allocation6], %s23
      %s25 = sshll.u32 [#allocation5], 4
      %s26 = int_to_ptr.vmem [resolvable:$true] %s25
      %31 = dma.hbm_to_vmem [thread:$0]  %s1, 2048, %s26, [#allocation6], 128, 128, 8
    $region9: #{tpu_custom_call.1} parent=1 // pred_fallthru
      _
    // Predicated region
    $region10: #{tpu_custom_call.1} parent=1 // pred_check
      _
    $region11: #{tpu_custom_call.1} parent=1 // pred_check_branch
      %33 = sbr.rel (0) target = $region13
    $region12: #{tpu_custom_call.1} parent=1 // pred_region
      %34 = dma.done [#allocation3], 128
    $region13: #{tpu_custom_call.1} parent=1 // pred_fallthru
      _
    // Predicated region
    $region14: #{tpu_custom_call.1} parent=1 // pred_check
      _
    $region15: #{tpu_custom_call.1} parent=1 // pred_check_branch
      %36 = sbr.rel (0) target = $region17
    $region16: #{tpu_custom_call.1} parent=1 // pred_region
      %37 = dma.done [#allocation6], 2048
    $region17: #{tpu_custom_call.1} parent=1 // pred_fallthru
      _
    %v38 = vld [vmem:[#allocation5] sm:$0xff]
    %v39 = vld [vmem:[#allocation5 + $0x8] sm:$0xff]
    %v40 = vld [vmem:[#allocation5 + $0x10] sm:$0xff]
    %v41 = vld [vmem:[#allocation5 + $0x18] sm:$0xff]
    %v42 = vld [vmem:[#allocation5 + $0x20] sm:$0xff]
    %v43 = vld [vmem:[#allocation5 + $0x28] sm:$0xff]
    %v44 = vld [vmem:[#allocation5 + $0x30] sm:$0xff]
    %v45 = vld [vmem:[#allocation5 + $0x38] sm:$0xff]
    %v46 = vld [vmem:[#allocation5 + $0x40] sm:$0xff]
    %v47 = vld [vmem:[#allocation5 + $0x48] sm:$0xff]
    %v48 = vld [vmem:[#allocation5 + $0x50] sm:$0xff]
    %v49 = vld [vmem:[#allocation5 + $0x58] sm:$0xff]
    %v50 = vld [vmem:[#allocation5 + $0x60] sm:$0xff]
    %v51 = vld [vmem:[#allocation5 + $0x68] sm:$0xff]
    %v52 = vld [vmem:[#allocation5 + $0x70] sm:$0xff]
    %v53 = vld [vmem:[#allocation5 + $0x78] sm:$0xff]
    %v54 = vld [vmem:[#allocation2] sm:$0xff]
    %v55 = vmax.f32 %v54, -0.01941121
    %v56 = vmin.f32 %v55, 0.01941121
    %v57 = vsub.f32 %v54, %v56
    %58 = vmatprep.subr.mxu0 0.0
    %59 = vmatpush1.msra.mxu0 %v38
    %60 = vmatprep.subr.mxu0 0.0
    %61 = vmatpush1.msra.mxu0 %v39
    %62 = vmatprep.subr.mxu0 0.0
    %63 = vmatpush1.msra.mxu0 %v40
    %64 = vmatprep.subr.mxu0 0.0
    %65 = vmatpush1.msra.mxu0 %v41
    %66 = vmatprep.subr.mxu0 0.0
    %67 = vmatpush1.msra.mxu0 %v42
    %68 = vmatprep.subr.mxu0 0.0
    %69 = vmatpush1.msra.mxu0 %v43
    %70 = vmatprep.subr.mxu0 0.0
    %71 = vmatpush1.msra.mxu0 %v44
    %72 = vmatprep.subr.mxu0 0.0
    %73 = vmatpush1.msra.mxu0 %v45
    %74 = vmatprep.subr.mxu0 0.0
    %75 = vmatpush1.msra.mxu0 %v46
    %76 = vmatprep.subr.mxu0 0.0
    %77 = vmatpush1.msra.mxu0 %v47
    %78 = vmatprep.subr.mxu0 0.0
    %79 = vmatpush1.msra.mxu0 %v48
    %80 = vmatprep.subr.mxu0 0.0
    %81 = vmatpush1.msra.mxu0 %v49
    %82 = vmatprep.subr.mxu0 0.0
    %83 = vmatpush1.msra.mxu0 %v50
    %84 = vmatprep.subr.mxu0 0.0
    %85 = vmatpush1.msra.mxu0 %v51
    %86 = vmatprep.subr.mxu0 0.0
    %87 = vmatpush1.msra.mxu0 %v52
    %88 = vmatprep.subr.mxu0 0.0
    %89 = vmatpush1.msra.mxu0 %v53
    %90 = vmatprep.subr.mxu0 0.0
    %91 = vmatpush1.msra.mxu0 0.0
    %92 = vmatprep.subr.mxu0 0.0
    %93 = vmatpush1.msra.mxu0 0.0
    %94 = vmatprep.subr.mxu0 0.0
    %95 = vmatpush1.msra.mxu0 0.0
    %96 = vmatprep.subr.mxu0 0.0
    %97 = vmatpush1.msra.mxu0 0.0
    %98 = vmatprep.subr.mxu0 0.0
    %99 = vmatpush1.msra.mxu0 0.0
    %100 = vmatprep.subr.mxu0 0.0
    %101 = vmatpush1.msra.mxu0 0.0
    %102 = vmatprep.subr.mxu0 0.0
    %103 = vmatpush1.msra.mxu0 0.0
    %104 = vmatprep.subr.mxu0 0.0
    %105 = vmatpush1.msra.mxu0 0.0
    %106 = vmatprep.subr.mxu0 0.0
    %107 = vmatpush1.msra.mxu0 0.0
    %108 = vmatprep.subr.mxu0 0.0
    %109 = vmatpush1.msra.mxu0 0.0
    %110 = vmatprep.subr.mxu0 0.0
    %111 = vmatpush1.msra.mxu0 0.0
    %112 = vmatprep.subr.mxu0 0.0
    %113 = vmatpush1.msra.mxu0 0.0
    %114 = vmatprep.subr.mxu0 0.0
    %115 = vmatpush1.msra.mxu0 0.0
    %116 = vmatprep.subr.mxu0 0.0
    %117 = vmatpush1.msra.mxu0 0.0
    %118 = vmatprep.subr.mxu0 0.0
    %119 = vmatpush1.msra.mxu0 0.0
    %120 = vmatprep.subr.mxu0 0.0
    %121 = vmatpush1.msra.mxu0 0.0
    %122 = vmatprep.mubr.f32.mxu0 0.0
    %123 = vmatmul.mubr.f32.gmra.mrb[0].mxu0 %v57
    %v124 = vpop.f32.mrb[0].mxu0
    %v125 = vadd.f32 %v54, %v124
    %v126 = vpop.f32.mrb[0].mxu0
    %127 = vdwg.mxu0
    %v128 = vmax.f32 %v125, -0.01941121
    %v129 = vmin.f32 %v128, 0.01941121
    %v130 = vsub.f32 %v125, %v129
    %131 = vmatprep.subr.mxu0 0.0
    %132 = vmatpush1.msra.mxu0 %v38
    %133 = vmatprep.subr.mxu0 0.0
    %134 = vmatpush1.msra.mxu0 %v39
    %135 = vmatprep.subr.mxu0 0.0
    %136 = vmatpush1.msra.mxu0 %v40
    %137 = vmatprep.subr.mxu0 0.0
    %138 = vmatpush1.msra.mxu0 %v41
    %139 = vmatprep.subr.mxu0 0.0
    %140 = vmatpush1.msra.mxu0 %v42
    %141 = vmatprep.subr.mxu0 0.0
    %142 = vmatpush1.msra.mxu0 %v43
    %143 = vmatprep.subr.mxu0 0.0
    %144 = vmatpush1.msra.mxu0 %v44
    %145 = vmatprep.subr.mxu0 0.0
    %146 = vmatpush1.msra.mxu0 %v45
    %147 = vmatprep.subr.mxu0 0.0
    %148 = vmatpush1.msra.mxu0 %v46
    %149 = vmatprep.subr.mxu0 0.0
    %150 = vmatpush1.msra.mxu0 %v47
    %151 = vmatprep.subr.mxu0 0.0
    %152 = vmatpush1.msra.mxu0 %v48
    %153 = vmatprep.subr.mxu0 0.0
    %154 = vmatpush1.msra.mxu0 %v49
    %155 = vmatprep.subr.mxu0 0.0
    %156 = vmatpush1.msra.mxu0 %v50
    %157 = vmatprep.subr.mxu0 0.0
    %158 = vmatpush1.msra.mxu0 %v51
    %159 = vmatprep.subr.mxu0 0.0
    %160 = vmatpush1.msra.mxu0 %v52
    %161 = vmatprep.subr.mxu0 0.0
    %162 = vmatpush1.msra.mxu0 %v53
    %163 = vmatprep.subr.mxu0 0.0
    %164 = vmatpush1.msra.mxu0 0.0
    %165 = vmatprep.subr.mxu0 0.0
    %166 = vmatpush1.msra.mxu0 0.0
    %167 = vmatprep.subr.mxu0 0.0
    %168 = vmatpush1.msra.mxu0 0.0
    %169 = vmatprep.subr.mxu0 0.0
    %170 = vmatpush1.msra.mxu0 0.0
    %171 = vmatprep.subr.mxu0 0.0
    %172 = vmatpush1.msra.mxu0 0.0
    %173 = vmatprep.subr.mxu0 0.0
    %174 = vmatpush1.msra.mxu0 0.0
    %175 = vmatprep.subr.mxu0 0.0
    %176 = vmatpush1.msra.mxu0 0.0
    %177 = vmatprep.subr.mxu0 0.0
    %178 = vmatpush1.msra.mxu0 0.0
    %179 = vmatprep.subr.mxu0 0.0
    %180 = vmatpush1.msra.mxu0 0.0
    %181 = vmatprep.subr.mxu0 0.0
    %182 = vmatpush1.msra.mxu0 0.0
    %183 = vmatprep.subr.mxu0 0.0
    %184 = vmatpush1.msra.mxu0 0.0
    %185 = vmatprep.subr.mxu0 0.0
    %186 = vmatpush1.msra.mxu0 0.0
    %187 = vmatprep.subr.mxu0 0.0
    %188 = vmatpush1.msra.mxu0 0.0
    %189 = vmatprep.subr.mxu0 0.0
    %190 = vmatpush1.msra.mxu0 0.0
    %191 = vmatprep.subr.mxu0 0.0
    %192 = vmatpush1.msra.mxu0 0.0
    %193 = vmatprep.subr.mxu0 0.0
    %194 = vmatpush1.msra.mxu0 0.0
    %195 = vmatprep.mubr.f32.mxu0 0.0
    %196 = vmatmul.mubr.f32.gmra.mrb[0].mxu0 %v130
    %v197 = vpop.f32.mrb[0].mxu0
    %v198 = vadd.f32 %v54, %v197
    %v199 = vpop.f32.mrb[0].mxu0
    %200 = vdwg.mxu0
    %v201 = vmax.f32 %v198, -0.01941121
    %v202 = vmin.f32 %v201, 0.01941121
    %v203 = vsub.f32 %v198, %v202
    %204 = vmatprep.subr.mxu0 0.0
    %205 = vmatpush1.msra.mxu0 %v38
    %206 = vmatprep.subr.mxu0 0.0
    %207 = vmatpush1.msra.mxu0 %v39
    %208 = vmatprep.subr.mxu0 0.0
    %209 = vmatpush1.msra.mxu0 %v40
    %210 = vmatprep.subr.mxu0 0.0
    %211 = vmatpush1.msra.mxu0 %v41
    %212 = vmatprep.subr.mxu0 0.0
    %213 = vmatpush1.msra.mxu0 %v42
    %214 = vmatprep.subr.mxu0 0.0
    %215 = vmatpush1.msra.mxu0 %v43
    %216 = vmatprep.subr.mxu0 0.0
    %217 = vmatpush1.msra.mxu0 %v44
    %218 = vmatprep.subr.mxu0 0.0
    %219 = vmatpush1.msra.mxu0 %v45
    %220 = vmatprep.subr.mxu0 0.0
    %221 = vmatpush1.msra.mxu0 %v46
    %222 = vmatprep.subr.mxu0 0.0
    %223 = vmatpush1.msra.mxu0 %v47
    %224 = vmatprep.subr.mxu0 0.0
    %225 = vmatpush1.msra.mxu0 %v48
    %226 = vmatprep.subr.mxu0 0.0
    %227 = vmatpush1.msra.mxu0 %v49
    %228 = vmatprep.subr.mxu0 0.0
    %229 = vmatpush1.msra.mxu0 %v50
    %230 = vmatprep.subr.mxu0 0.0
    %231 = vmatpush1.msra.mxu0 %v51
    %232 = vmatprep.subr.mxu0 0.0
    %233 = vmatpush1.msra.mxu0 %v52
    %234 = vmatprep.subr.mxu0 0.0
    %235 = vmatpush1.msra.mxu0 %v53
    %236 = vmatprep.subr.mxu0 0.0
    %237 = vmatpush1.msra.mxu0 0.0
    %238 = vmatprep.subr.mxu0 0.0
    %239 = vmatpush1.msra.mxu0 0.0
    %240 = vmatprep.subr.mxu0 0.0
    %241 = vmatpush1.msra.mxu0 0.0
    %242 = vmatprep.subr.mxu0 0.0
    %243 = vmatpush1.msra.mxu0 0.0
    %244 = vmatprep.subr.mxu0 0.0
    %245 = vmatpush1.msra.mxu0 0.0
    %246 = vmatprep.subr.mxu0 0.0
    %247 = vmatpush1.msra.mxu0 0.0
    %248 = vmatprep.subr.mxu0 0.0
    %249 = vmatpush1.msra.mxu0 0.0
    %250 = vmatprep.subr.mxu0 0.0
    %251 = vmatpush1.msra.mxu0 0.0
    %252 = vmatprep.subr.mxu0 0.0
    %253 = vmatpush1.msra.mxu0 0.0
    %254 = vmatprep.subr.mxu0 0.0
    %255 = vmatpush1.msra.mxu0 0.0
    %256 = vmatprep.subr.mxu0 0.0
    %257 = vmatpush1.msra.mxu0 0.0
    %258 = vmatprep.subr.mxu0 0.0
    %259 = vmatpush1.msra.mxu0 0.0
    %260 = vmatprep.subr.mxu0 0.0
    %261 = vmatpush1.msra.mxu0 0.0
    %262 = vmatprep.subr.mxu0 0.0
    %263 = vmatpush1.msra.mxu0 0.0
    %264 = vmatprep.subr.mxu0 0.0
    %265 = vmatpush1.msra.mxu0 0.0
    %266 = vmatprep.subr.mxu0 0.0
    %267 = vmatpush1.msra.mxu0 0.0
    %268 = vmatprep.mubr.f32.mxu0 0.0
    %269 = vmatmul.mubr.f32.gmra.mrb[0].mxu0 %v203
    %v270 = vpop.f32.mrb[0].mxu0
    %v271 = vadd.f32 %v54, %v270
    %v272 = vpop.f32.mrb[0].mxu0
    %273 = vdwg.mxu0
    %v274 = vmax.f32 %v271, -0.01941121
    %v275 = vmin.f32 %v274, 0.01941121
    %v276 = vsub.f32 %v271, %v275
    %277 = vmatprep.subr.mxu0 0.0
    %278 = vmatpush1.msra.mxu0 %v38
    %279 = vmatprep.subr.mxu0 0.0
    %280 = vmatpush1.msra.mxu0 %v39
    %281 = vmatprep.subr.mxu0 0.0
    %282 = vmatpush1.msra.mxu0 %v40
    %283 = vmatprep.subr.mxu0 0.0
    %284 = vmatpush1.msra.mxu0 %v41
    %285 = vmatprep.subr.mxu0 0.0
    %286 = vmatpush1.msra.mxu0 %v42
    %287 = vmatprep.subr.mxu0 0.0
    %288 = vmatpush1.msra.mxu0 %v43
    %289 = vmatprep.subr.mxu0 0.0
    %290 = vmatpush1.msra.mxu0 %v44
    %291 = vmatprep.subr.mxu0 0.0
    %292 = vmatpush1.msra.mxu0 %v45
    %293 = vmatprep.subr.mxu0 0.0
    %294 = vmatpush1.msra.mxu0 %v46
    %295 = vmatprep.subr.mxu0 0.0
    %296 = vmatpush1.msra.mxu0 %v47
    %297 = vmatprep.subr.mxu0 0.0
    %298 = vmatpush1.msra.mxu0 %v48
    %299 = vmatprep.subr.mxu0 0.0
    %300 = vmatpush1.msra.mxu0 %v49
    %301 = vmatprep.subr.mxu0 0.0
    %302 = vmatpush1.msra.mxu0 %v50
    %303 = vmatprep.subr.mxu0 0.0
    %304 = vmatpush1.msra.mxu0 %v51
    %305 = vmatprep.subr.mxu0 0.0
    %306 = vmatpush1.msra.mxu0 %v52
    %307 = vmatprep.subr.mxu0 0.0
    %308 = vmatpush1.msra.mxu0 %v53
    %309 = vmatprep.subr.mxu0 0.0
    %310 = vmatpush1.msra.mxu0 0.0
    %311 = vmatprep.subr.mxu0 0.0
    %312 = vmatpush1.msra.mxu0 0.0
    %313 = vmatprep.subr.mxu0 0.0
    %314 = vmatpush1.msra.mxu0 0.0
    %315 = vmatprep.subr.mxu0 0.0
    %316 = vmatpush1.msra.mxu0 0.0
    %317 = vmatprep.subr.mxu0 0.0
    %318 = vmatpush1.msra.mxu0 0.0
    %319 = vmatprep.subr.mxu0 0.0
    %320 = vmatpush1.msra.mxu0 0.0
    %321 = vmatprep.subr.mxu0 0.0
    %322 = vmatpush1.msra.mxu0 0.0
    %323 = vmatprep.subr.mxu0 0.0
    %324 = vmatpush1.msra.mxu0 0.0
    %325 = vmatprep.subr.mxu0 0.0
    %326 = vmatpush1.msra.mxu0 0.0
    %327 = vmatprep.subr.mxu0 0.0
    %328 = vmatpush1.msra.mxu0 0.0
    %329 = vmatprep.subr.mxu0 0.0
    %330 = vmatpush1.msra.mxu0 0.0
    %331 = vmatprep.subr.mxu0 0.0
    %332 = vmatpush1.msra.mxu0 0.0
    %333 = vmatprep.subr.mxu0 0.0
    %334 = vmatpush1.msra.mxu0 0.0
    %335 = vmatprep.subr.mxu0 0.0
    %336 = vmatpush1.msra.mxu0 0.0
    %337 = vmatprep.subr.mxu0 0.0
    %338 = vmatpush1.msra.mxu0 0.0
    %339 = vmatprep.subr.mxu0 0.0
    %340 = vmatpush1.msra.mxu0 0.0
    %341 = vmatprep.mubr.f32.mxu0 0.0
    %342 = vmatmul.mubr.f32.gmra.mrb[0].mxu0 %v276
    %v343 = vpop.f32.mrb[0].mxu0
    %v344 = vadd.f32 %v54, %v343
    %v345 = vpop.f32.mrb[0].mxu0
    %346 = vdwg.mxu0
    %v347 = vmax.f32 %v344, -0.01941121
    %v348 = vmin.f32 %v347, 0.01941121
    %v349 = vsub.f32 %v344, %v348
    %350 = vmatprep.subr.mxu0 0.0
    %351 = vmatpush1.msra.mxu0 %v38
    %352 = vmatprep.subr.mxu0 0.0
    %353 = vmatpush1.msra.mxu0 %v39
    %354 = vmatprep.subr.mxu0 0.0
    %355 = vmatpush1.msra.mxu0 %v40
    %356 = vmatprep.subr.mxu0 0.0
    %357 = vmatpush1.msra.mxu0 %v41
    %358 = vmatprep.subr.mxu0 0.0
    %359 = vmatpush1.msra.mxu0 %v42
    %360 = vmatprep.subr.mxu0 0.0
    %361 = vmatpush1.msra.mxu0 %v43
    %362 = vmatprep.subr.mxu0 0.0
    %363 = vmatpush1.msra.mxu0 %v44
    %364 = vmatprep.subr.mxu0 0.0
    %365 = vmatpush1.msra.mxu0 %v45
    %366 = vmatprep.subr.mxu0 0.0
    %367 = vmatpush1.msra.mxu0 %v46
    %368 = vmatprep.subr.mxu0 0.0
    %369 = vmatpush1.msra.mxu0 %v47
    %370 = vmatprep.subr.mxu0 0.0
    %371 = vmatpush1.msra.mxu0 %v48
    %372 = vmatprep.subr.mxu0 0.0
    %373 = vmatpush1.msra.mxu0 %v49
    %374 = vmatprep.subr.mxu0 0.0
    %375 = vmatpush1.msra.mxu0 %v50
    %376 = vmatprep.subr.mxu0 0.0
    %377 = vmatpush1.msra.mxu0 %v51
    %378 = vmatprep.subr.mxu0 0.0
    %379 = vmatpush1.msra.mxu0 %v52
    %380 = vmatprep.subr.mxu0 0.0
    %381 = vmatpush1.msra.mxu0 %v53
    %382 = vmatprep.subr.mxu0 0.0
    %383 = vmatpush1.msra.mxu0 0.0
    %384 = vmatprep.subr.mxu0 0.0
    %385 = vmatpush1.msra.mxu0 0.0
    %386 = vmatprep.subr.mxu0 0.0
    %387 = vmatpush1.msra.mxu0 0.0
    %388 = vmatprep.subr.mxu0 0.0
    %389 = vmatpush1.msra.mxu0 0.0
    %390 = vmatprep.subr.mxu0 0.0
    %391 = vmatpush1.msra.mxu0 0.0
    %392 = vmatprep.subr.mxu0 0.0
    %393 = vmatpush1.msra.mxu0 0.0
    %394 = vmatprep.subr.mxu0 0.0
    %395 = vmatpush1.msra.mxu0 0.0
    %396 = vmatprep.subr.mxu0 0.0
    %397 = vmatpush1.msra.mxu0 0.0
    %398 = vmatprep.subr.mxu0 0.0
    %399 = vmatpush1.msra.mxu0 0.0
    %400 = vmatprep.subr.mxu0 0.0
    %401 = vmatpush1.msra.mxu0 0.0
    %402 = vmatprep.subr.mxu0 0.0
    %403 = vmatpush1.msra.mxu0 0.0
    %404 = vmatprep.subr.mxu0 0.0
    %405 = vmatpush1.msra.mxu0 0.0
    %406 = vmatprep.subr.mxu0 0.0
    %407 = vmatpush1.msra.mxu0 0.0
    %408 = vmatprep.subr.mxu0 0.0
    %409 = vmatpush1.msra.mxu0 0.0
    %410 = vmatprep.subr.mxu0 0.0
    %411 = vmatpush1.msra.mxu0 0.0
    %412 = vmatprep.subr.mxu0 0.0
    %413 = vmatpush1.msra.mxu0 0.0
    %414 = vmatprep.mubr.f32.mxu0 0.0
    %415 = vmatmul.mubr.f32.gmra.mrb[0].mxu0 %v349
    %v416 = vpop.f32.mrb[0].mxu0
    %v417 = vadd.f32 %v54, %v416
    %v418 = vpop.f32.mrb[0].mxu0
    %419 = vdwg.mxu0
    %v420 = vmax.f32 %v417, -0.01941121
    %v421 = vmin.f32 %v420, 0.01941121
    %v422 = vsub.f32 %v417, %v421
    %423 = vmatprep.subr.mxu0 0.0
    %424 = vmatpush1.msra.mxu0 %v38
    %425 = vmatprep.subr.mxu0 0.0
    %426 = vmatpush1.msra.mxu0 %v39
    %427 = vmatprep.subr.mxu0 0.0
    %428 = vmatpush1.msra.mxu0 %v40
    %429 = vmatprep.subr.mxu0 0.0
    %430 = vmatpush1.msra.mxu0 %v41
    %431 = vmatprep.subr.mxu0 0.0
    %432 = vmatpush1.msra.mxu0 %v42
    %433 = vmatprep.subr.mxu0 0.0
    %434 = vmatpush1.msra.mxu0 %v43
    %435 = vmatprep.subr.mxu0 0.0
    %436 = vmatpush1.msra.mxu0 %v44
    %437 = vmatprep.subr.mxu0 0.0
    %438 = vmatpush1.msra.mxu0 %v45
    %439 = vmatprep.subr.mxu0 0.0
    %440 = vmatpush1.msra.mxu0 %v46
    %441 = vmatprep.subr.mxu0 0.0
    %442 = vmatpush1.msra.mxu0 %v47
    %443 = vmatprep.subr.mxu0 0.0
    %444 = vmatpush1.msra.mxu0 %v48
    %445 = vmatprep.subr.mxu0 0.0
    %446 = vmatpush1.msra.mxu0 %v49
    %447 = vmatprep.subr.mxu0 0.0
    %448 = vmatpush1.msra.mxu0 %v50
    %449 = vmatprep.subr.mxu0 0.0
    %450 = vmatpush1.msra.mxu0 %v51
    %451 = vmatprep.subr.mxu0 0.0
    %452 = vmatpush1.msra.mxu0 %v52
    %453 = vmatprep.subr.mxu0 0.0
    %454 = vmatpush1.msra.mxu0 %v53
    %455 = vmatprep.subr.mxu0 0.0
    %456 = vmatpush1.msra.mxu0 0.0
    %457 = vmatprep.subr.mxu0 0.0
    %458 = vmatpush1.msra.mxu0 0.0
    %459 = vmatprep.subr.mxu0 0.0
    %460 = vmatpush1.msra.mxu0 0.0
    %461 = vmatprep.subr.mxu0 0.0
    %462 = vmatpush1.msra.mxu0 0.0
    %463 = vmatprep.subr.mxu0 0.0
    %464 = vmatpush1.msra.mxu0 0.0
    %465 = vmatprep.subr.mxu0 0.0
    %466 = vmatpush1.msra.mxu0 0.0
    %467 = vmatprep.subr.mxu0 0.0
    %468 = vmatpush1.msra.mxu0 0.0
    %469 = vmatprep.subr.mxu0 0.0
    %470 = vmatpush1.msra.mxu0 0.0
    %471 = vmatprep.subr.mxu0 0.0
    %472 = vmatpush1.msra.mxu0 0.0
    %473 = vmatprep.subr.mxu0 0.0
    %474 = vmatpush1.msra.mxu0 0.0
    %475 = vmatprep.subr.mxu0 0.0
    %476 = vmatpush1.msra.mxu0 0.0
    %477 = vmatprep.subr.mxu0 0.0
    %478 = vmatpush1.msra.mxu0 0.0
    %479 = vmatprep.subr.mxu0 0.0
    %480 = vmatpush1.msra.mxu0 0.0
    %481 = vmatprep.subr.mxu0 0.0
    %482 = vmatpush1.msra.mxu0 0.0
    %483 = vmatprep.subr.mxu0 0.0
    %484 = vmatpush1.msra.mxu0 0.0
    %485 = vmatprep.subr.mxu0 0.0
    %486 = vmatpush1.msra.mxu0 0.0
    %487 = vmatprep.mubr.f32.mxu0 0.0
    %488 = vmatmul.mubr.f32.gmra.mrb[0].mxu0 %v422
    %v489 = vpop.f32.mrb[0].mxu0
    %v490 = vadd.f32 %v54, %v489
    %v491 = vpop.f32.mrb[0].mxu0
    %492 = vdwg.mxu0
    %v493 = vmax.f32 %v490, -0.01941121
    %v494 = vmin.f32 %v493, 0.01941121
    %v495 = vsub.f32 %v490, %v494
    %496 = vmatprep.subr.mxu0 0.0
    %497 = vmatpush1.msra.mxu0 %v38
    %498 = vmatprep.subr.mxu0 0.0
    %499 = vmatpush1.msra.mxu0 %v39
    %500 = vmatprep.subr.mxu0 0.0
    %501 = vmatpush1.msra.mxu0 %v40
    %502 = vmatprep.subr.mxu0 0.0
    %503 = vmatpush1.msra.mxu0 %v41
    %504 = vmatprep.subr.mxu0 0.0
    %505 = vmatpush1.msra.mxu0 %v42
    %506 = vmatprep.subr.mxu0 0.0
    %507 = vmatpush1.msra.mxu0 %v43
    %508 = vmatprep.subr.mxu0 0.0
    %509 = vmatpush1.msra.mxu0 %v44
    %510 = vmatprep.subr.mxu0 0.0
    %511 = vmatpush1.msra.mxu0 %v45
    %512 = vmatprep.subr.mxu0 0.0
    %513 = vmatpush1.msra.mxu0 %v46
    %514 = vmatprep.subr.mxu0 0.0
    %515 = vmatpush1.msra.mxu0 %v47
    %516 = vmatprep.subr.mxu0 0.0
    %517 = vmatpush1.msra.mxu0 %v48
    %518 = vmatprep.subr.mxu0 0.0
    %519 = vmatpush1.msra.mxu0 %v49
    %520 = vmatprep.subr.mxu0 0.0
    %521 = vmatpush1.msra.mxu0 %v50
    %522 = vmatprep.subr.mxu0 0.0
    %523 = vmatpush1.msra.mxu0 %v51
    %524 = vmatprep.subr.mxu0 0.0
    %525 = vmatpush1.msra.mxu0 %v52
    %526 = vmatprep.subr.mxu0 0.0
    %527 = vmatpush1.msra.mxu0 %v53
    %528 = vmatprep.subr.mxu0 0.0
    %529 = vmatpush1.msra.mxu0 0.0
    %530 = vmatprep.subr.mxu0 0.0
    %531 = vmatpush1.msra.mxu0 0.0
    %532 = vmatprep.subr.mxu0 0.0
    %533 = vmatpush1.msra.mxu0 0.0
    %534 = vmatprep.subr.mxu0 0.0
    %535 = vmatpush1.msra.mxu0 0.0
    %536 = vmatprep.subr.mxu0 0.0
    %537 = vmatpush1.msra.mxu0 0.0
    %538 = vmatprep.subr.mxu0 0.0
    %539 = vmatpush1.msra.mxu0 0.0
    %540 = vmatprep.subr.mxu0 0.0
    %541 = vmatpush1.msra.mxu0 0.0
    %542 = vmatprep.subr.mxu0 0.0
    %543 = vmatpush1.msra.mxu0 0.0
    %544 = vmatprep.subr.mxu0 0.0
    %545 = vmatpush1.msra.mxu0 0.0
    %546 = vmatprep.subr.mxu0 0.0
    %547 = vmatpush1.msra.mxu0 0.0
    %548 = vmatprep.subr.mxu0 0.0
    %549 = vmatpush1.msra.mxu0 0.0
    %550 = vmatprep.subr.mxu0 0.0
    %551 = vmatpush1.msra.mxu0 0.0
    %552 = vmatprep.subr.mxu0 0.0
    %553 = vmatpush1.msra.mxu0 0.0
    %554 = vmatprep.subr.mxu0 0.0
    %555 = vmatpush1.msra.mxu0 0.0
    %556 = vmatprep.subr.mxu0 0.0
    %557 = vmatpush1.msra.mxu0 0.0
    %558 = vmatprep.subr.mxu0 0.0
    %559 = vmatpush1.msra.mxu0 0.0
    %560 = vmatprep.mubr.f32.mxu0 0.0
    %561 = vmatmul.mubr.f32.gmra.mrb[0].mxu0 %v495
    %v562 = vpop.f32.mrb[0].mxu0
    %v563 = vadd.f32 %v54, %v562
    %v564 = vpop.f32.mrb[0].mxu0
    %565 = vdwg.mxu0
    %v566 = vmax.f32 %v563, -0.01941121
    %v567 = vmin.f32 %v566, 0.01941121
    %v568 = vsub.f32 %v563, %v567
    %569 = vst [vmem:[#allocation7] sm:$0xff] %v568
    // Predicated region
    $region18: #{tpu_custom_call.1} parent=1 // pred_check
      _
    $region19: #{tpu_custom_call.1} parent=1 // pred_check_branch
      %571 = sbr.rel (0) target = $region21
    $region20: #{tpu_custom_call.1} parent=1 // pred_region
      %s573 = ssub.s32 128, 128
      %574 = vsyncadd [#allocation4], %s573
      %s576 = sshll.u32 [#allocation7], 4
      %s577 = int_to_ptr.vmem [resolvable:$true] %s576
      %579 = dma.vmem_to_hbm [thread:$0]  %s577, 128, %s2, [#allocation4]
    $region21: #{tpu_custom_call.1} parent=1 // pred_fallthru
      _
    // Predicated region
    $region22: #{tpu_custom_call.1} parent=1 // pred_check
      _
    $region23: #{tpu_custom_call.1} parent=1 // pred_check_branch
      %581 = sbr.rel (0) target = $region25
    $region24: #{tpu_custom_call.1} parent=1 // pred_region
      %582 = dma.done [#allocation4], 128
    $region25: #{tpu_custom_call.1} parent=1 // pred_fallthru
      _
    %583 = vsyncpa [#allocation3], 1
    %584 = vsyncpa [#allocation6], 1
    %585 = vsyncpa [#allocation4], 1

// kernel: tpu_custom_call.1
$region0: #{tpu_custom_call.1}
  #allocation0 [shape = 'u32[]', space=smem, size = 0x4, offset = 0x4, fixed_abs, tag = 'smem constant byte address 0x4 - core index']
  #allocation1 [shape = 'u32[144,128]{1,0:T(1,128)}', space=vmem, size = 0x12000, scoped, tag = 'internal scratch']
  %s0 = inlined_call_operand.hbm [shape: f32[8,128], index: 0, kind: input, shape index: {}]
  %s1 = inlined_call_operand.hbm [shape: f32[128,128], index: 1, kind: input, shape index: {}]
  %s2 = inlined_call_operand.hbm [shape: f32[8,128], index: 2, kind: output, shape index: {}]
  %s3 = sld [smem:[#allocation0]]
  $region26: #{tpu_custom_call.1} parent=0
    _
  %s5 = ssub.s32 1, %s3
  %s6 = scalar_select 0, %s5, %s3
  $region1: #{tpu_custom_call.1} parent=0
    #allocation2 [shape = 'u8[4096]{0}', space=vmem, size = 0x1000, scoped, tag = 'input window, operand 0, single buffered']
    #allocation3 [shape = 's32[1]{0}', space=sflag, size = 0x4, scoped, tag = 'scoped memory for tpu_custom_call.1']
    #allocation4 [shape = 's32[1]{0}', space=sflag, size = 0x4, scoped, tag = 'scoped memory for tpu_custom_call.1']
    #allocation5 [shape = 'u8[65536]{0}', space=vmem, size = 0x10000, scoped, tag = 'input window, operand 1, single buffered']
    #allocation6 [shape = 's32[1]{0}', space=sflag, size = 0x4, scoped, tag = 'scoped memory for tpu_custom_call.1']
    #allocation7 [shape = 'u8[4096]{0}', space=vmem, size = 0x1000, scoped, tag = 'output window, operand 0, single buffered']
    %7 = vsyncpa [#allocation3], 0
    %8 = vsyncpa [#allocation6], 0
    %9 = vsyncpa [#allocation4], 0
    // Predicated region
    $region2: #{tpu_custom_call.1} parent=1 // pred_check
      _
    $region3: #{tpu_custom_call.1} parent=1 // pred_check_branch
      %11 = sbr.rel (0) target = $region5
    $region4: #{tpu_custom_call.1} parent=1 // pred_region
      %s13 = ssub.s32 128, 128
      %14 = vsyncadd [#allocation3], %s13
      %s16 = sshll.u32 [#allocation2], 4
      %s17 = int_to_ptr.vmem [resolvable:$true] %s16
      %19 = dma.hbm_to_vmem [thread:$0]  %s0, 128, %s17, [#allocation3]
    $region5: #{tpu_custom_call.1} parent=1 // pred_fallthru
      _
    // Predicated region
    $region6: #{tpu_custom_call.1} parent=1 // pred_check
      _
    $region7: #{tpu_custom_call.1} parent=1 // pred_check_branch
      %21 = sbr.rel (0) target = $region9
    $region8: #{tpu_custom_call.1} parent=1 // pred_region
      %s23 = ssub.s32 2048, 2048
      %24 = vsyncadd [#allocation6], %s23
      %s25 = sshll.u32 [#allocation5], 4
      %s26 = int_to_ptr.vmem [resolvable:$true] %s25
      %31 = dma.hbm_to_vmem [thread:$0]  %s1, 2048, %s26, [#allocation6], 128, 128, 8
    $region9: #{tpu_custom_call.1} parent=1 // pred_fallthru
      _
    // Predicated region
    $region10: #{tpu_custom_call.1} parent=1 // pred_check
      _
    $region11: #{tpu_custom_call.1} parent=1 // pred_check_branch
      %33 = sbr.rel (0) target = $region13
    $region12: #{tpu_custom_call.1} parent=1 // pred_region
      %34 = dma.done [#allocation3], 128
    $region13: #{tpu_custom_call.1} parent=1 // pred_fallthru
      _
    // Predicated region
    $region14: #{tpu_custom_call.1} parent=1 // pred_check
      _
    $region15: #{tpu_custom_call.1} parent=1 // pred_check_branch
      %36 = sbr.rel (0) target = $region17
    $region16: #{tpu_custom_call.1} parent=1 // pred_region
      %37 = dma.done [#allocation6], 2048
    $region17: #{tpu_custom_call.1} parent=1 // pred_fallthru
      _
    %v38 = vld [vmem:[#allocation5] sm:$0xff]
    %v39 = vld [vmem:[#allocation5 + $0x8] sm:$0xff]
    %v40 = vld [vmem:[#allocation5 + $0x10] sm:$0xff]
    %v41 = vld [vmem:[#allocation5 + $0x18] sm:$0xff]
    %v42 = vld [vmem:[#allocation5 + $0x20] sm:$0xff]
    %v43 = vld [vmem:[#allocation5 + $0x28] sm:$0xff]
    %v44 = vld [vmem:[#allocation5 + $0x30] sm:$0xff]
    %v45 = vld [vmem:[#allocation5 + $0x38] sm:$0xff]
    %v46 = vld [vmem:[#allocation5 + $0x40] sm:$0xff]
    %v47 = vld [vmem:[#allocation5 + $0x48] sm:$0xff]
    %v48 = vld [vmem:[#allocation5 + $0x50] sm:$0xff]
    %v49 = vld [vmem:[#allocation5 + $0x58] sm:$0xff]
    %v50 = vld [vmem:[#allocation5 + $0x60] sm:$0xff]
    %v51 = vld [vmem:[#allocation5 + $0x68] sm:$0xff]
    %v52 = vld [vmem:[#allocation5 + $0x70] sm:$0xff]
    %v53 = vld [vmem:[#allocation5 + $0x78] sm:$0xff]
    %v54 = vld [vmem:[#allocation2] sm:$0xff]
    %v55 = vmax.f32 %v54, -0.01941121
    %v56 = vmin.f32 %v55, 0.01941121
    %v57 = vsub.f32 %v54, %v56
    %58 = vmatprep.subr.mxu0 0.0
    %59 = vmatpush1.msra.mxu0 %v38
    %60 = vmatprep.subr.mxu0 0.0
    %61 = vmatpush1.msra.mxu0 %v39
    %62 = vmatprep.subr.mxu0 0.0
    %63 = vmatpush1.msra.mxu0 %v40
    %64 = vmatprep.subr.mxu0 0.0
    %65 = vmatpush1.msra.mxu0 %v41
    %66 = vmatprep.subr.mxu0 0.0
    %67 = vmatpush1.msra.mxu0 %v42
    %68 = vmatprep.subr.mxu0 0.0
    %69 = vmatpush1.msra.mxu0 %v43
    %70 = vmatprep.subr.mxu0 0.0
    %71 = vmatpush1.msra.mxu0 %v44
    %72 = vmatprep.subr.mxu0 0.0
    %73 = vmatpush1.msra.mxu0 %v45
    %74 = vmatprep.subr.mxu0 0.0
    %75 = vmatpush1.msra.mxu0 %v46
    %76 = vmatprep.subr.mxu0 0.0
    %77 = vmatpush1.msra.mxu0 %v47
    %78 = vmatprep.subr.mxu0 0.0
    %79 = vmatpush1.msra.mxu0 %v48
    %80 = vmatprep.subr.mxu0 0.0
    %81 = vmatpush1.msra.mxu0 %v49
    %82 = vmatprep.subr.mxu0 0.0
    %83 = vmatpush1.msra.mxu0 %v50
    %84 = vmatprep.subr.mxu0 0.0
    %85 = vmatpush1.msra.mxu0 %v51
    %86 = vmatprep.subr.mxu0 0.0
    %87 = vmatpush1.msra.mxu0 %v52
    %88 = vmatprep.subr.mxu0 0.0
    %89 = vmatpush1.msra.mxu0 %v53
    %90 = vmatprep.subr.mxu0 0.0
    %91 = vmatpush1.msra.mxu0 0.0
    %92 = vmatprep.subr.mxu0 0.0
    %93 = vmatpush1.msra.mxu0 0.0
    %94 = vmatprep.subr.mxu0 0.0
    %95 = vmatpush1.msra.mxu0 0.0
    %96 = vmatprep.subr.mxu0 0.0
    %97 = vmatpush1.msra.mxu0 0.0
    %98 = vmatprep.subr.mxu0 0.0
    %99 = vmatpush1.msra.mxu0 0.0
    %100 = vmatprep.subr.mxu0 0.0
    %101 = vmatpush1.msra.mxu0 0.0
    %102 = vmatprep.subr.mxu0 0.0
    %103 = vmatpush1.msra.mxu0 0.0
    %104 = vmatprep.subr.mxu0 0.0
    %105 = vmatpush1.msra.mxu0 0.0
    %106 = vmatprep.subr.mxu0 0.0
    %107 = vmatpush1.msra.mxu0 0.0
    %108 = vmatprep.subr.mxu0 0.0
    %109 = vmatpush1.msra.mxu0 0.0
    %110 = vmatprep.subr.mxu0 0.0
    %111 = vmatpush1.msra.mxu0 0.0
    %112 = vmatprep.subr.mxu0 0.0
    %113 = vmatpush1.msra.mxu0 0.0
    %114 = vmatprep.subr.mxu0 0.0
    %115 = vmatpush1.msra.mxu0 0.0
    %116 = vmatprep.subr.mxu0 0.0
    %117 = vmatpush1.msra.mxu0 0.0
    %118 = vmatprep.subr.mxu0 0.0
    %119 = vmatpush1.msra.mxu0 0.0
    %120 = vmatprep.subr.mxu0 0.0
    %121 = vmatpush1.msra.mxu0 0.0
    %122 = vmatprep.mubr.f32.mxu0 0.0
    %123 = vmatmul.mubr.f32.gmra.mrb[0].mxu0 %v57
    %v124 = vpop.f32.mrb[0].mxu0
    %v125 = vadd.f32 %v54, %v124
    %v126 = vpop.f32.mrb[0].mxu0
    %127 = vdwg.mxu0
    %v128 = vmax.f32 %v125, -0.01941121
    %v129 = vmin.f32 %v128, 0.01941121
    %v130 = vsub.f32 %v125, %v129
    %131 = vmatprep.subr.mxu0 0.0
    %132 = vmatpush1.msra.mxu0 %v38
    %133 = vmatprep.subr.mxu0 0.0
    %134 = vmatpush1.msra.mxu0 %v39
    %135 = vmatprep.subr.mxu0 0.0
    %136 = vmatpush1.msra.mxu0 %v40
    %137 = vmatprep.subr.mxu0 0.0
    %138 = vmatpush1.msra.mxu0 %v41
    %139 = vmatprep.subr.mxu0 0.0
    %140 = vmatpush1.msra.mxu0 %v42
    %141 = vmatprep.subr.mxu0 0.0
    %142 = vmatpush1.msra.mxu0 %v43
    %143 = vmatprep.subr.mxu0 0.0
    %144 = vmatpush1.msra.mxu0 %v44
    %145 = vmatprep.subr.mxu0 0.0
    %146 = vmatpush1.msra.mxu0 %v45
    %147 = vmatprep.subr.mxu0 0.0
    %148 = vmatpush1.msra.mxu0 %v46
    %149 = vmatprep.subr.mxu0 0.0
    %150 = vmatpush1.msra.mxu0 %v47
    %151 = vmatprep.subr.mxu0 0.0
    %152 = vmatpush1.msra.mxu0 %v48
    %153 = vmatprep.subr.mxu0 0.0
    %154 = vmatpush1.msra.mxu0 %v49
    %155 = vmatprep.subr.mxu0 0.0
    %156 = vmatpush1.msra.mxu0 %v50
    %157 = vmatprep.subr.mxu0 0.0
    %158 = vmatpush1.msra.mxu0 %v51
    %159 = vmatprep.subr.mxu0 0.0
    %160 = vmatpush1.msra.mxu0 %v52
    %161 = vmatprep.subr.mxu0 0.0
    %162 = vmatpush1.msra.mxu0 %v53
    %163 = vmatprep.subr.mxu0 0.0
    %164 = vmatpush1.msra.mxu0 0.0
    %165 = vmatprep.subr.mxu0 0.0
    %166 = vmatpush1.msra.mxu0 0.0
    %167 = vmatprep.subr.mxu0 0.0
    %168 = vmatpush1.msra.mxu0 0.0
    %169 = vmatprep.subr.mxu0 0.0
    %170 = vmatpush1.msra.mxu0 0.0
    %171 = vmatprep.subr.mxu0 0.0
    %172 = vmatpush1.msra.mxu0 0.0
    %173 = vmatprep.subr.mxu0 0.0
    %174 = vmatpush1.msra.mxu0 0.0
    %175 = vmatprep.subr.mxu0 0.0
    %176 = vmatpush1.msra.mxu0 0.0
    %177 = vmatprep.subr.mxu0 0.0
    %178 = vmatpush1.msra.mxu0 0.0
    %179 = vmatprep.subr.mxu0 0.0
    %180 = vmatpush1.msra.mxu0 0.0
    %181 = vmatprep.subr.mxu0 0.0
    %182 = vmatpush1.msra.mxu0 0.0
    %183 = vmatprep.subr.mxu0 0.0
    %184 = vmatpush1.msra.mxu0 0.0
    %185 = vmatprep.subr.mxu0 0.0
    %186 = vmatpush1.msra.mxu0 0.0
    %187 = vmatprep.subr.mxu0 0.0
    %188 = vmatpush1.msra.mxu0 0.0
    %189 = vmatprep.subr.mxu0 0.0
    %190 = vmatpush1.msra.mxu0 0.0
    %191 = vmatprep.subr.mxu0 0.0
    %192 = vmatpush1.msra.mxu0 0.0
    %193 = vmatprep.subr.mxu0 0.0
    %194 = vmatpush1.msra.mxu0 0.0
    %195 = vmatprep.mubr.f32.mxu0 0.0
    %196 = vmatmul.mubr.f32.gmra.mrb[0].mxu0 %v130
    %v197 = vpop.f32.mrb[0].mxu0
    %v198 = vadd.f32 %v54, %v197
    %v199 = vpop.f32.mrb[0].mxu0
    %200 = vdwg.mxu0
    %v201 = vmax.f32 %v198, -0.01941121
    %v202 = vmin.f32 %v201, 0.01941121
    %v203 = vsub.f32 %v198, %v202
    %204 = vmatprep.subr.mxu0 0.0
    %205 = vmatpush1.msra.mxu0 %v38
    %206 = vmatprep.subr.mxu0 0.0
    %207 = vmatpush1.msra.mxu0 %v39
    %208 = vmatprep.subr.mxu0 0.0
    %209 = vmatpush1.msra.mxu0 %v40
    %210 = vmatprep.subr.mxu0 0.0
    %211 = vmatpush1.msra.mxu0 %v41
    %212 = vmatprep.subr.mxu0 0.0
    %213 = vmatpush1.msra.mxu0 %v42
    %214 = vmatprep.subr.mxu0 0.0
    %215 = vmatpush1.msra.mxu0 %v43
    %216 = vmatprep.subr.mxu0 0.0
    %217 = vmatpush1.msra.mxu0 %v44
    %218 = vmatprep.subr.mxu0 0.0
    %219 = vmatpush1.msra.mxu0 %v45
    %220 = vmatprep.subr.mxu0 0.0
    %221 = vmatpush1.msra.mxu0 %v46
    %222 = vmatprep.subr.mxu0 0.0
    %223 = vmatpush1.msra.mxu0 %v47
    %224 = vmatprep.subr.mxu0 0.0
    %225 = vmatpush1.msra.mxu0 %v48
    %226 = vmatprep.subr.mxu0 0.0
    %227 = vmatpush1.msra.mxu0 %v49
    %228 = vmatprep.subr.mxu0 0.0
    %229 = vmatpush1.msra.mxu0 %v50
    %230 = vmatprep.subr.mxu0 0.0
    %231 = vmatpush1.msra.mxu0 %v51
    %232 = vmatprep.subr.mxu0 0.0
    %233 = vmatpush1.msra.mxu0 %v52
    %234 = vmatprep.subr.mxu0 0.0
    %235 = vmatpush1.msra.mxu0 %v53
    %236 = vmatprep.subr.mxu0 0.0
    %237 = vmatpush1.msra.mxu0 0.0
    %238 = vmatprep.subr.mxu0 0.0
    %239 = vmatpush1.msra.mxu0 0.0
    %240 = vmatprep.subr.mxu0 0.0
    %241 = vmatpush1.msra.mxu0 0.0
    %242 = vmatprep.subr.mxu0 0.0
    %243 = vmatpush1.msra.mxu0 0.0
    %244 = vmatprep.subr.mxu0 0.0
    %245 = vmatpush1.msra.mxu0 0.0
    %246 = vmatprep.subr.mxu0 0.0
    %247 = vmatpush1.msra.mxu0 0.0
    %248 = vmatprep.subr.mxu0 0.0
    %249 = vmatpush1.msra.mxu0 0.0
    %250 = vmatprep.subr.mxu0 0.0
    %251 = vmatpush1.msra.mxu0 0.0
    %252 = vmatprep.subr.mxu0 0.0
    %253 = vmatpush1.msra.mxu0 0.0
    %254 = vmatprep.subr.mxu0 0.0
    %255 = vmatpush1.msra.mxu0 0.0
    %256 = vmatprep.subr.mxu0 0.0
    %257 = vmatpush1.msra.mxu0 0.0
    %258 = vmatprep.subr.mxu0 0.0
    %259 = vmatpush1.msra.mxu0 0.0
    %260 = vmatprep.subr.mxu0 0.0
    %261 = vmatpush1.msra.mxu0 0.0
    %262 = vmatprep.subr.mxu0 0.0
    %263 = vmatpush1.msra.mxu0 0.0
    %264 = vmatprep.subr.mxu0 0.0
    %265 = vmatpush1.msra.mxu0 0.0
    %266 = vmatprep.subr.mxu0 0.0
    %267 = vmatpush1.msra.mxu0 0.0
    %268 = vmatprep.mubr.f32.mxu0 0.0
    %269 = vmatmul.mubr.f32.gmra.mrb[0].mxu0 %v203
    %v270 = vpop.f32.mrb[0].mxu0
    %v271 = vadd.f32 %v54, %v270
    %v272 = vpop.f32.mrb[0].mxu0
    %273 = vdwg.mxu0
    %v274 = vmax.f32 %v271, -0.01941121
    %v275 = vmin.f32 %v274, 0.01941121
    %v276 = vsub.f32 %v271, %v275
    %277 = vmatprep.subr.mxu0 0.0
    %278 = vmatpush1.msra.mxu0 %v38
    %279 = vmatprep.subr.mxu0 0.0
    %280 = vmatpush1.msra.mxu0 %v39
    %281 = vmatprep.subr.mxu0 0.0
    %282 = vmatpush1.msra.mxu0 %v40
    %283 = vmatprep.subr.mxu0 0.0
    %284 = vmatpush1.msra.mxu0 %v41
    %285 = vmatprep.subr.mxu0 0.0
    %286 = vmatpush1.msra.mxu0 %v42
    %287 = vmatprep.subr.mxu0 0.0
    %288 = vmatpush1.msra.mxu0 %v43
    %289 = vmatprep.subr.mxu0 0.0
    %290 = vmatpush1.msra.mxu0 %v44
    %291 = vmatprep.subr.mxu0 0.0
    %292 = vmatpush1.msra.mxu0 %v45
    %293 = vmatprep.subr.mxu0 0.0
    %294 = vmatpush1.msra.mxu0 %v46
    %295 = vmatprep.subr.mxu0 0.0
    %296 = vmatpush1.msra.mxu0 %v47
    %297 = vmatprep.subr.mxu0 0.0
    %298 = vmatpush1.msra.mxu0 %v48
    %299 = vmatprep.subr.mxu0 0.0
    %300 = vmatpush1.msra.mxu0 %v49
    %301 = vmatprep.subr.mxu0 0.0
    %302 = vmatpush1.msra.mxu0 %v50
    %303 = vmatprep.subr.mxu0 0.0
    %304 = vmatpush1.msra.mxu0 %v51
    %305 = vmatprep.subr.mxu0 0.0
    %306 = vmatpush1.msra.mxu0 %v52
    %307 = vmatprep.subr.mxu0 0.0
    %308 = vmatpush1.msra.mxu0 %v53
    %309 = vmatprep.subr.mxu0 0.0
    %310 = vmatpush1.msra.mxu0 0.0
    %311 = vmatprep.subr.mxu0 0.0
    %312 = vmatpush1.msra.mxu0 0.0
    %313 = vmatprep.subr.mxu0 0.0
    %314 = vmatpush1.msra.mxu0 0.0
    %315 = vmatprep.subr.mxu0 0.0
    %316 = vmatpush1.msra.mxu0 0.0
    %317 = vmatprep.subr.mxu0 0.0
    %318 = vmatpush1.msra.mxu0 0.0
    %319 = vmatprep.subr.mxu0 0.0
    %320 = vmatpush1.msra.mxu0 0.0
    %321 = vmatprep.subr.mxu0 0.0
    %322 = vmatpush1.msra.mxu0 0.0
    %323 = vmatprep.subr.mxu0 0.0
    %324 = vmatpush1.msra.mxu0 0.0
    %325 = vmatprep.subr.mxu0 0.0
    %326 = vmatpush1.msra.mxu0 0.0
    %327 = vmatprep.subr.mxu0 0.0
    %328 = vmatpush1.msra.mxu0 0.0
    %329 = vmatprep.subr.mxu0 0.0
    %330 = vmatpush1.msra.mxu0 0.0
    %331 = vmatprep.subr.mxu0 0.0
    %332 = vmatpush1.msra.mxu0 0.0
    %333 = vmatprep.subr.mxu0 0.0
    %334 = vmatpush1.msra.mxu0 0.0
    %335 = vmatprep.subr.mxu0 0.0
    %336 = vmatpush1.msra.mxu0 0.0
    %337 = vmatprep.subr.mxu0 0.0
    %338 = vmatpush1.msra.mxu0 0.0
    %339 = vmatprep.subr.mxu0 0.0
    %340 = vmatpush1.msra.mxu0 0.0
    %341 = vmatprep.mubr.f32.mxu0 0.0
    %342 = vmatmul.mubr.f32.gmra.mrb[0].mxu0 %v276
    %v343 = vpop.f32.mrb[0].mxu0
    %v344 = vadd.f32 %v54, %v343
    %v345 = vpop.f32.mrb[0].mxu0
    %346 = vdwg.mxu0
    %v347 = vmax.f32 %v344, -0.01941121
    %v348 = vmin.f32 %v347, 0.01941121
    %v349 = vsub.f32 %v344, %v348
    %350 = vmatprep.subr.mxu0 0.0
    %351 = vmatpush1.msra.mxu0 %v38
    %352 = vmatprep.subr.mxu0 0.0
    %353 = vmatpush1.msra.mxu0 %v39
    %354 = vmatprep.subr.mxu0 0.0
    %355 = vmatpush1.msra.mxu0 %v40
    %356 = vmatprep.subr.mxu0 0.0
    %357 = vmatpush1.msra.mxu0 %v41
    %358 = vmatprep.subr.mxu0 0.0
    %359 = vmatpush1.msra.mxu0 %v42
    %360 = vmatprep.subr.mxu0 0.0
    %361 = vmatpush1.msra.mxu0 %v43
    %362 = vmatprep.subr.mxu0 0.0
    %363 = vmatpush1.msra.mxu0 %v44
    %364 = vmatprep.subr.mxu0 0.0
    %365 = vmatpush1.msra.mxu0 %v45
    %366 = vmatprep.subr.mxu0 0.0
    %367 = vmatpush1.msra.mxu0 %v46
    %368 = vmatprep.subr.mxu0 0.0
    %369 = vmatpush1.msra.mxu0 %v47
    %370 = vmatprep.subr.mxu0 0.0
    %371 = vmatpush1.msra.mxu0 %v48
    %372 = vmatprep.subr.mxu0 0.0
    %373 = vmatpush1.msra.mxu0 %v49
    %374 = vmatprep.subr.mxu0 0.0
    %375 = vmatpush1.msra.mxu0 %v50
    %376 = vmatprep.subr.mxu0 0.0
    %377 = vmatpush1.msra.mxu0 %v51
    %378 = vmatprep.subr.mxu0 0.0
    %379 = vmatpush1.msra.mxu0 %v52
    %380 = vmatprep.subr.mxu0 0.0
    %381 = vmatpush1.msra.mxu0 %v53
    %382 = vmatprep.subr.mxu0 0.0
    %383 = vmatpush1.msra.mxu0 0.0
    %384 = vmatprep.subr.mxu0 0.0
    %385 = vmatpush1.msra.mxu0 0.0
    %386 = vmatprep.subr.mxu0 0.0
    %387 = vmatpush1.msra.mxu0 0.0
    %388 = vmatprep.subr.mxu0 0.0
    %389 = vmatpush1.msra.mxu0 0.0
    %390 = vmatprep.subr.mxu0 0.0
    %391 = vmatpush1.msra.mxu0 0.0
    %392 = vmatprep.subr.mxu0 0.0
    %393 = vmatpush1.msra.mxu0 0.0
    %394 = vmatprep.subr.mxu0 0.0
    %395 = vmatpush1.msra.mxu0 0.0
    %396 = vmatprep.subr.mxu0 0.0
    %397 = vmatpush1.msra.mxu0 0.0
    %398 = vmatprep.subr.mxu0 0.0
    %399 = vmatpush1.msra.mxu0 0.0
    %400 = vmatprep.subr.mxu0 0.0
    %401 = vmatpush1.msra.mxu0 0.0
    %402 = vmatprep.subr.mxu0 0.0
    %403 = vmatpush1.msra.mxu0 0.0
    %404 = vmatprep.subr.mxu0 0.0
    %405 = vmatpush1.msra.mxu0 0.0
    %406 = vmatprep.subr.mxu0 0.0
    %407 = vmatpush1.msra.mxu0 0.0
    %408 = vmatprep.subr.mxu0 0.0
    %409 = vmatpush1.msra.mxu0 0.0
    %410 = vmatprep.subr.mxu0 0.0
    %411 = vmatpush1.msra.mxu0 0.0
    %412 = vmatprep.subr.mxu0 0.0
    %413 = vmatpush1.msra.mxu0 0.0
    %414 = vmatprep.mubr.f32.mxu0 0.0
    %415 = vmatmul.mubr.f32.gmra.mrb[0].mxu0 %v349
    %v416 = vpop.f32.mrb[0].mxu0
    %v417 = vadd.f32 %v54, %v416
    %v418 = vpop.f32.mrb[0].mxu0
    %419 = vdwg.mxu0
    %v420 = vmax.f32 %v417, -0.01941121
    %v421 = vmin.f32 %v420, 0.01941121
    %v422 = vsub.f32 %v417, %v421
    %423 = vmatprep.subr.mxu0 0.0
    %424 = vmatpush1.msra.mxu0 %v38
    %425 = vmatprep.subr.mxu0 0.0
    %426 = vmatpush1.msra.mxu0 %v39
    %427 = vmatprep.subr.mxu0 0.0
    %428 = vmatpush1.msra.mxu0 %v40
    %429 = vmatprep.subr.mxu0 0.0
    %430 = vmatpush1.msra.mxu0 %v41
    %431 = vmatprep.subr.mxu0 0.0
    %432 = vmatpush1.msra.mxu0 %v42
    %433 = vmatprep.subr.mxu0 0.0
    %434 = vmatpush1.msra.mxu0 %v43
    %435 = vmatprep.subr.mxu0 0.0
    %436 = vmatpush1.msra.mxu0 %v44
    %437 = vmatprep.subr.mxu0 0.0
    %438 = vmatpush1.msra.mxu0 %v45
    %439 = vmatprep.subr.mxu0 0.0
    %440 = vmatpush1.msra.mxu0 %v46
    %441 = vmatprep.subr.mxu0 0.0
    %442 = vmatpush1.msra.mxu0 %v47
    %443 = vmatprep.subr.mxu0 0.0
    %444 = vmatpush1.msra.mxu0 %v48
    %445 = vmatprep.subr.mxu0 0.0
    %446 = vmatpush1.msra.mxu0 %v49
    %447 = vmatprep.subr.mxu0 0.0
    %448 = vmatpush1.msra.mxu0 %v50
    %449 = vmatprep.subr.mxu0 0.0
    %450 = vmatpush1.msra.mxu0 %v51
    %451 = vmatprep.subr.mxu0 0.0
    %452 = vmatpush1.msra.mxu0 %v52
    %453 = vmatprep.subr.mxu0 0.0
    %454 = vmatpush1.msra.mxu0 %v53
    %455 = vmatprep.subr.mxu0 0.0
    %456 = vmatpush1.msra.mxu0 0.0
    %457 = vmatprep.subr.mxu0 0.0
    %458 = vmatpush1.msra.mxu0 0.0
    %459 = vmatprep.subr.mxu0 0.0
    %460 = vmatpush1.msra.mxu0 0.0
    %461 = vmatprep.subr.mxu0 0.0
    %462 = vmatpush1.msra.mxu0 0.0
    %463 = vmatprep.subr.mxu0 0.0
    %464 = vmatpush1.msra.mxu0 0.0
    %465 = vmatprep.subr.mxu0 0.0
    %466 = vmatpush1.msra.mxu0 0.0
    %467 = vmatprep.subr.mxu0 0.0
    %468 = vmatpush1.msra.mxu0 0.0
    %469 = vmatprep.subr.mxu0 0.0
    %470 = vmatpush1.msra.mxu0 0.0
    %471 = vmatprep.subr.mxu0 0.0
    %472 = vmatpush1.msra.mxu0 0.0
    %473 = vmatprep.subr.mxu0 0.0
    %474 = vmatpush1.msra.mxu0 0.0
    %475 = vmatprep.subr.mxu0 0.0
    %476 = vmatpush1.msra.mxu0 0.0
    %477 = vmatprep.subr.mxu0 0.0
    %478 = vmatpush1.msra.mxu0 0.0
    %479 = vmatprep.subr.mxu0 0.0
    %480 = vmatpush1.msra.mxu0 0.0
    %481 = vmatprep.subr.mxu0 0.0
    %482 = vmatpush1.msra.mxu0 0.0
    %483 = vmatprep.subr.mxu0 0.0
    %484 = vmatpush1.msra.mxu0 0.0
    %485 = vmatprep.subr.mxu0 0.0
    %486 = vmatpush1.msra.mxu0 0.0
    %487 = vmatprep.mubr.f32.mxu0 0.0
    %488 = vmatmul.mubr.f32.gmra.mrb[0].mxu0 %v422
    %v489 = vpop.f32.mrb[0].mxu0
    %v490 = vadd.f32 %v54, %v489
    %v491 = vpop.f32.mrb[0].mxu0
    %492 = vdwg.mxu0
    %v493 = vmax.f32 %v490, -0.01941121
    %v494 = vmin.f32 %v493, 0.01941121
    %v495 = vsub.f32 %v490, %v494
    %496 = vmatprep.subr.mxu0 0.0
    %497 = vmatpush1.msra.mxu0 %v38
    %498 = vmatprep.subr.mxu0 0.0
    %499 = vmatpush1.msra.mxu0 %v39
    %500 = vmatprep.subr.mxu0 0.0
    %501 = vmatpush1.msra.mxu0 %v40
    %502 = vmatprep.subr.mxu0 0.0
    %503 = vmatpush1.msra.mxu0 %v41
    %504 = vmatprep.subr.mxu0 0.0
    %505 = vmatpush1.msra.mxu0 %v42
    %506 = vmatprep.subr.mxu0 0.0
    %507 = vmatpush1.msra.mxu0 %v43
    %508 = vmatprep.subr.mxu0 0.0
    %509 = vmatpush1.msra.mxu0 %v44
    %510 = vmatprep.subr.mxu0 0.0
    %511 = vmatpush1.msra.mxu0 %v45
    %512 = vmatprep.subr.mxu0 0.0
    %513 = vmatpush1.msra.mxu0 %v46
    %514 = vmatprep.subr.mxu0 0.0
    %515 = vmatpush1.msra.mxu0 %v47
    %516 = vmatprep.subr.mxu0 0.0
    %517 = vmatpush1.msra.mxu0 %v48
    %518 = vmatprep.subr.mxu0 0.0
    %519 = vmatpush1.msra.mxu0 %v49
    %520 = vmatprep.subr.mxu0 0.0
    %521 = vmatpush1.msra.mxu0 %v50
    %522 = vmatprep.subr.mxu0 0.0
    %523 = vmatpush1.msra.mxu0 %v51
    %524 = vmatprep.subr.mxu0 0.0
    %525 = vmatpush1.msra.mxu0 %v52
    %526 = vmatprep.subr.mxu0 0.0
    %527 = vmatpush1.msra.mxu0 %v53
    %528 = vmatprep.subr.mxu0 0.0
    %529 = vmatpush1.msra.mxu0 0.0
    %530 = vmatprep.subr.mxu0 0.0
    %531 = vmatpush1.msra.mxu0 0.0
    %532 = vmatprep.subr.mxu0 0.0
    %533 = vmatpush1.msra.mxu0 0.0
    %534 = vmatprep.subr.mxu0 0.0
    %535 = vmatpush1.msra.mxu0 0.0
    %536 = vmatprep.subr.mxu0 0.0
    %537 = vmatpush1.msra.mxu0 0.0
    %538 = vmatprep.subr.mxu0 0.0
    %539 = vmatpush1.msra.mxu0 0.0
    %540 = vmatprep.subr.mxu0 0.0
    %541 = vmatpush1.msra.mxu0 0.0
    %542 = vmatprep.subr.mxu0 0.0
    %543 = vmatpush1.msra.mxu0 0.0
    %544 = vmatprep.subr.mxu0 0.0
    %545 = vmatpush1.msra.mxu0 0.0
    %546 = vmatprep.subr.mxu0 0.0
    %547 = vmatpush1.msra.mxu0 0.0
    %548 = vmatprep.subr.mxu0 0.0
    %549 = vmatpush1.msra.mxu0 0.0
    %550 = vmatprep.subr.mxu0 0.0
    %551 = vmatpush1.msra.mxu0 0.0
    %552 = vmatprep.subr.mxu0 0.0
    %553 = vmatpush1.msra.mxu0 0.0
    %554 = vmatprep.subr.mxu0 0.0
    %555 = vmatpush1.msra.mxu0 0.0
    %556 = vmatprep.subr.mxu0 0.0
    %557 = vmatpush1.msra.mxu0 0.0
    %558 = vmatprep.subr.mxu0 0.0
    %559 = vmatpush1.msra.mxu0 0.0
    %560 = vmatprep.mubr.f32.mxu0 0.0
    %561 = vmatmul.mubr.f32.gmra.mrb[0].mxu0 %v495
    %v562 = vpop.f32.mrb[0].mxu0
    %v563 = vadd.f32 %v54, %v562
    %v564 = vpop.f32.mrb[0].mxu0
    %565 = vdwg.mxu0
    %v566 = vmax.f32 %v563, -0.01941121
    %v567 = vmin.f32 %v566, 0.01941121
    %v568 = vsub.f32 %v563, %v567
    %569 = vst [vmem:[#allocation7] sm:$0xff] %v568
    // Predicated region
    $region18: #{tpu_custom_call.1} parent=1 // pred_check
      _
    $region19: #{tpu_custom_call.1} parent=1 // pred_check_branch
      %571 = sbr.rel (0) target = $region21
    $region20: #{tpu_custom_call.1} parent=1 // pred_region
      %s573 = ssub.s32 128, 128
      %574 = vsyncadd [#allocation4], %s573
      %s576 = sshll.u32 [#allocation7], 4
      %s577 = int_to_ptr.vmem [resolvable:$true] %s576
      %579 = dma.vmem_to_hbm [thread:$0]  %s577, 128, %s2, [#allocation4]
    $region21: #{tpu_custom_call.1} parent=1 // pred_fallthru
      _
    // Predicated region
    $region22: #{tpu_custom_call.1} parent=1 // pred_check
      _
    $region23: #{tpu_custom_call.1} parent=1 // pred_check_branch
      %581 = sbr.rel (0) target = $region25
    $region24: #{tpu_custom_call.1} parent=1 // pred_region
      %582 = dma.done [#allocation4], 128
    $region25: #{tpu_custom_call.1} parent=1 // pred_fallthru
      _
    %583 = vsyncpa [#allocation3], 1
    %584 = vsyncpa [#allocation6], 1
    %585 = vsyncpa [#allocation4], 1

</llo_original>
